<compile_context>
chip_gen: v5e
topology: v5e:2x2
jax: 0.10.0
libtpu: 0.0.40
codegen_flags: <defaults>
</compile_context>

<pallas_src>
import math

import jax
import jax.numpy as jnp
from jax.experimental import pallas as pl
from jax.experimental.pallas import tpu as pltpu


# ----------------------------- host-side helpers ---------------------------

def _bilinear_axis_matrix(n_out, n_in):
    """(n_out, n_in) 1-D bilinear interpolation matrix, half-pixel centers
    with edge clamp (== PyTorch Upsample(align_corners=False))."""
    coord = (jnp.arange(n_out, dtype=jnp.float32) + 0.5) * (n_in / n_out) - 0.5
    lo = jnp.floor(coord)
    frac = coord - lo
    lo_i = jnp.clip(lo.astype(jnp.int32), 0, n_in - 1)
    hi_i = jnp.clip(lo.astype(jnp.int32) + 1, 0, n_in - 1)
    rows = jnp.arange(n_out)
    m = jnp.zeros((n_out, n_in), jnp.float32)
    m = m.at[rows, lo_i].add(1.0 - frac)
    m = m.at[rows, hi_i].add(frac)
    return m


def _bilinear_1d_taps(n_out, n_in):
    """Static Python taps (lo, hi, w_lo, w_hi) per output row for the
    H-direction upsample (half-pixel centers, edge clamp)."""
    taps = []
    for i in range(n_out):
        c = (i + 0.5) * (n_in / n_out) - 0.5
        lo = math.floor(c)
        frac = c - lo
        lo_i = min(max(lo, 0), n_in - 1)
        hi_i = min(max(lo + 1, 0), n_in - 1)
        taps.append((lo_i, hi_i, 1.0 - frac, frac))
    return taps


def _conv3x3_col_masks(H, W):
    """(2, H*W) f32 column-validity masks: row 0 kills j==0 (for dx=-1 taps),
    row 1 kills j==W-1 (for dx=+1 taps).  Top/bottom padding comes for free
    from the zero fringes of the padded scratch."""
    j = jnp.arange(W)
    left = (j != 0).astype(jnp.float32)
    right = (j != W - 1).astype(jnp.float32)
    return jnp.stack([jnp.tile(left, H), jnp.tile(right, H)])


def fold_bn(w, gamma, beta, running_mean=None, running_var=None, eps=1e-5):
    """Fold eval-mode BatchNorm into the preceding (bias-free) conv weight."""
    cout = w.shape[0]
    if running_mean is None:
        running_mean = jnp.zeros((cout,), w.dtype)
    if running_var is None:
        running_var = jnp.ones((cout,), w.dtype)
    scale = gamma / jnp.sqrt(running_var + eps)
    w_f = w * scale.reshape((cout,) + (1,) * (w.ndim - 1))
    b_f = beta - running_mean * scale
    return w_f, b_f


def flatten_conv3x3(w):
    """(Cout, Cin, 3, 3) -> (Cout, 9*Cin), tap-major / channel-minor, matching
    the kernel's im2col row ordering."""
    cout, cin = w.shape[0], w.shape[1]
    return jnp.transpose(w, (0, 2, 3, 1)).reshape(cout, 9 * cin)


# ------------------------------- fused kernel ------------------------------

def _make_fused_kernel(Cs, Cin, Cout, H, W, Hx, Wx, h_taps):
    HW = H * W
    C1 = 2 * Cs          # conv1 input channels: cat([skip, upsampled branch])
    C2 = Cout            # conv2 input channels
    PAD = W + 1          # flat offset of pixel (0, 0) in the padded scratch
    LP = HW + 2 * W + 2  # flat padded image length
    bf16 = jnp.bfloat16
    f32 = jnp.float32

    def kernel(skip_ref, x_ref, uw_ref, mask_ref, wup_ref, bup_ref,
               w1_ref, b1_ref, w2_ref, b2_ref, o_ref,
               p1, col1, p2, col2):

        # -- zero only the pad fringes (interior is fully overwritten below).
        #    Done every grid step so each TensorCore's private scratch is
        #    initialized (v7x parallel grid).
        p1[:, 0:PAD] = jnp.zeros((C1, PAD), f32)
        p1[:, PAD + HW:LP] = jnp.zeros((C1, LP - PAD - HW), f32)
        p2[:, 0:PAD] = jnp.zeros((C2, PAD), f32)
        p2[:, PAD + HW:LP] = jnp.zeros((C2, LP - PAD - HW), f32)

        # -- InterpConv, restructured: 1x1 conv (+ folded BN bias) on the
        #    LOW-res image first, then separable 2x bilinear upsample, then
        #    ReLU.  bf16 operands, f32 accumulation.
        h_small = jnp.dot(wup_ref[...], x_ref[0].astype(bf16),
                          preferred_element_type=f32) + bup_ref[...]  # (Cs, HxWx)

        # W-direction upsample: one tiny (Wx, W) matmul per low-res row.
        wrows = [
            jnp.dot(h_small[:, r * Wx:(r + 1) * Wx].astype(bf16), uw_ref[...],
                    preferred_element_type=f32)                        # (Cs, W)
            for r in range(Hx)
        ]

        # -- skip branch goes straight into the padded scratch: the channel
        #    concat never exists anywhere else.
        p1[0:Cs, PAD:PAD + HW] = skip_ref[0].astype(f32)

        # H-direction upsample + ReLU, written row by row into the scratch.
        for i in range(H):
            lo, hi, w_lo, w_hi = h_taps[i]
            if lo == hi:
                row = wrows[lo]
            else:
                row = w_lo * wrows[lo] + w_hi * wrows[hi]
            p1[Cs:C1, PAD + i * W:PAD + (i + 1) * W] = jnp.maximum(row, 0.0)

        # -- conv1: im2col (9*C1, HW) via lane-offset slices; only dx=+-1 taps
        #    need a (column) mask, then ONE K = 9*C1 bf16 matmul + bias + ReLU.
        for t in range(9):
            dy, dx = t // 3 - 1, t % 3 - 1
            off = PAD + dy * W + dx
            sl = p1[:, off:off + HW]
            if dx == -1:
                sl = sl * mask_ref[0:1, :]
            elif dx == 1:
                sl = sl * mask_ref[1:2, :]
            col1[t * C1:(t + 1) * C1, :] = sl.astype(bf16)
        y1 = jnp.dot(w1_ref[...], col1[...], preferred_element_type=f32)
        y1 = jnp.maximum(y1 + b1_ref[...], 0.0)                        # (Cout, HW)

        # -- conv2: same pattern on y1.
        p2[:, PAD:PAD + HW] = y1
        for t in range(9):
            dy, dx = t // 3 - 1, t % 3 - 1
            off = PAD + dy * W + dx
            sl = p2[:, off:off + HW]
            if dx == -1:
                sl = sl * mask_ref[0:1, :]
            elif dx == 1:
                sl = sl * mask_ref[1:2, :]
            col2[t * C2:(t + 1) * C2, :] = sl.astype(bf16)
        y2 = jnp.dot(w2_ref[...], col2[...], preferred_element_type=f32)
        y2 = jnp.maximum(y2 + b2_ref[...], 0.0)                        # (Cout, HW)

        o_ref[0] = y2.astype(o_ref.dtype)

    return kernel


def up_conv_block_forward(skip, x, params):
    """UpConvBlock forward. skip: (N, Cs, H, W), x: (N, Cin, H//2, W//2), NCHW.

    params (BN already folded, see fold_bn / flatten_conv3x3):
      w_up (Cs, Cin) bf16, b_up (Cs, 1) f32,
      w1 (Cout, 9*2*Cs) bf16, b1 (Cout, 1) f32,
      w2 (Cout, 9*Cout) bf16, b2 (Cout, 1) f32.
    """
    N, Cs, H, W = skip.shape
    _, Cin, Hx, Wx = x.shape
    assert H == 2 * Hx and W == 2 * Wx, "InterpConv upsample factor must be 2"
    Cout = params["w2"].shape[0]
    HW, HxWx = H * W, Hx * Wx
    assert HW % 128 == 0, "lane dim (H*W) must be a multiple of 128"
    Lp = HW + 2 * W + 2

    uw = _bilinear_axis_matrix(W, Wx).T.astype(jnp.bfloat16)   # (Wx, W)
    h_taps = _bilinear_1d_taps(H, Hx)
    masks = _conv3x3_col_masks(H, W)                           # (2, HW)

    skip_f = skip.reshape(N, Cs, HW)                            # free reshapes
    x_f = x.reshape(N, Cin, HxWx)

    kernel = _make_fused_kernel(Cs, Cin, Cout, H, W, Hx, Wx, h_taps)

    out_f = pl.pallas_call(
        kernel,
        out_shape=jax.ShapeDtypeStruct((N, Cout, HW), skip.dtype),
        grid=(N,),
        in_specs=[
            pl.BlockSpec((1, Cs, HW), lambda n: (n, 0, 0)),
            pl.BlockSpec((1, Cin, HxWx), lambda n: (n, 0, 0)),
            pl.BlockSpec((Wx, W), lambda n: (0, 0)),
            pl.BlockSpec((2, HW), lambda n: (0, 0)),
            pl.BlockSpec((Cs, Cin), lambda n: (0, 0)),
            pl.BlockSpec((Cs, 1), lambda n: (0, 0)),
            pl.BlockSpec((Cout, 9 * 2 * Cs), lambda n: (0, 0)),
            pl.BlockSpec((Cout, 1), lambda n: (0, 0)),
            pl.BlockSpec((Cout, 9 * Cout), lambda n: (0, 0)),
            pl.BlockSpec((Cout, 1), lambda n: (0, 0)),
        ],
        out_specs=pl.BlockSpec((1, Cout, HW), lambda n: (n, 0, 0)),
        scratch_shapes=[
            pltpu.VMEM((2 * Cs, Lp), jnp.float32),        # padded cat image
            pltpu.VMEM((9 * 2 * Cs, HW), jnp.bfloat16),   # im2col for conv1
            pltpu.VMEM((Cout, Lp), jnp.float32),          # padded conv1 output
            pltpu.VMEM((9 * Cout, HW), jnp.bfloat16),     # im2col for conv2
        ],
        compiler_params=pltpu.CompilerParams(
            dimension_semantics=("parallel",),
            vmem_limit_bytes=32 * 1024 * 1024),
    )(skip_f, x_f, uw, masks, params["w_up"], params["b_up"],
      params["w1"], params["b1"], params["w2"], params["b2"])

    return out_f.reshape(N, Cout, H, W)


# ------------------------------ Main ----------------------------------------

if __name__ == "__main__":
    key = jax.random.PRNGKey(0)
    ks = jax.random.split(key, 20)

    N = 2
    in_channels, skip_channels, out_channels = 8, 4, 4
    H, W = 16, 16
    Hx, Wx = H // 2, W // 2

    # NCHW inputs, same layout as the PyTorch module.
    skip = jax.random.normal(ks[0], (N, skip_channels, H, W), jnp.float32)
    x = jax.random.normal(ks[1], (N, in_channels, Hx, Wx), jnp.float32)

    # Raw PyTorch-layout parameters: conv weights (Cout, Cin, kh, kw), no conv
    # bias (BN follows), eval-mode BN gamma/beta + running stats.
    w_up = 0.1 * jax.random.normal(ks[2], (skip_channels, in_channels, 1, 1), jnp.float32)
    g_up = 1.0 + 0.1 * jax.random.normal(ks[3], (skip_channels,), jnp.float32)
    be_up = 0.05 * jax.random.normal(ks[4], (skip_channels,), jnp.float32)
    m_up = 0.1 * jax.random.normal(ks[5], (skip_channels,), jnp.float32)
    v_up = 1.0 + 0.1 * jnp.abs(jax.random.normal(ks[6], (skip_channels,), jnp.float32))

    w1 = 0.1 * jax.random.normal(ks[7], (out_channels, 2 * skip_channels, 3, 3), jnp.float32)
    g1 = 1.0 + 0.1 * jax.random.normal(ks[8], (out_channels,), jnp.float32)
    be1 = 0.05 * jax.random.normal(ks[9], (out_channels,), jnp.float32)
    m1 = 0.1 * jax.random.normal(ks[10], (out_channels,), jnp.float32)
    v1 = 1.0 + 0.1 * jnp.abs(jax.random.normal(ks[11], (out_channels,), jnp.float32))

    w2 = 0.1 * jax.random.normal(ks[12], (out_channels, out_channels, 3, 3), jnp.float32)
    g2 = 1.0 + 0.1 * jax.random.normal(ks[13], (out_channels,), jnp.float32)
    be2 = 0.05 * jax.random.normal(ks[14], (out_channels,), jnp.float32)
    m2 = 0.1 * jax.random.normal(ks[15], (out_channels,), jnp.float32)
    v2 = 1.0 + 0.1 * jnp.abs(jax.random.normal(ks[16], (out_channels,), jnp.float32))

    # Fold BN into the convs and pack into the kernel's (bf16 weight) layouts.
    w_up_f, b_up_f = fold_bn(w_up, g_up, be_up, m_up, v_up)
    w1_f, b1_f = fold_bn(w1, g1, be1, m1, v1)
    w2_f, b2_f = fold_bn(w2, g2, be2, m2, v2)
    params = dict(
        w_up=w_up_f.reshape(skip_channels, in_channels).astype(jnp.bfloat16),
        b_up=b_up_f.reshape(skip_channels, 1).astype(jnp.float32),
        w1=flatten_conv3x3(w1_f).astype(jnp.bfloat16),
        b1=b1_f.reshape(out_channels, 1).astype(jnp.float32),
        w2=flatten_conv3x3(w2_f).astype(jnp.bfloat16),
        b2=b2_f.reshape(out_channels, 1).astype(jnp.float32),
    )

    out = up_conv_block_forward(skip, x, params)
    jax.block_until_ready(out)
    assert out.shape == (N, out_channels, H, W), out.shape

    # Pure-JAX reference of the eval-mode PyTorch module (BN not folded, f32).
    def conv_bn_relu_ref(inp, w, gamma, beta, mean, var, pad):
        y = jax.lax.conv_general_dilated(
            inp, w, window_strides=(1, 1), padding=[(pad, pad), (pad, pad)],
            dimension_numbers=("NCHW", "OIHW", "NCHW"))
        s = gamma / jnp.sqrt(var + 1e-5)
        y = y * s[None, :, None, None] + (beta - mean * s)[None, :, None, None]
        return jnp.maximum(y, 0.0)

    x_up_ref = jax.image.resize(x, (N, in_channels, H, W), method="bilinear")
    h_ref = conv_bn_relu_ref(x_up_ref, w_up, g_up, be_up, m_up, v_up, 0)
    ref = jnp.concatenate([skip, h_ref], axis=1)
    ref = conv_bn_relu_ref(ref, w1, g1, be1, m1, v1, 1)
    ref = conv_bn_relu_ref(ref, w2, g2, be2, m2, v2, 1)
    err = float(jnp.max(jnp.abs(out - ref)))
    assert err < 5e-2, f"max abs diff vs reference = {err}"

    print("KERNEL_OK")
</pallas_src>

<mosaic_0001>
module attributes {stable_mosaic.version = 11 : i64} {
  func.func @kernel(%arg0: i32, %arg1: memref<1x4x256xf32, #tpu.memory_space<vmem>>, %arg2: memref<1x8x64xf32, #tpu.memory_space<vmem>>, %arg3: memref<8x16xbf16, #tpu.memory_space<vmem>>, %arg4: memref<2x256xf32, #tpu.memory_space<vmem>>, %arg5: memref<4x8xbf16, #tpu.memory_space<vmem>>, %arg6: memref<4x1xf32, #tpu.memory_space<vmem>>, %arg7: memref<4x72xbf16, #tpu.memory_space<vmem>>, %arg8: memref<4x1xf32, #tpu.memory_space<vmem>>, %arg9: memref<4x36xbf16, #tpu.memory_space<vmem>>, %arg10: memref<4x1xf32, #tpu.memory_space<vmem>>, %arg11: memref<1x4x256xf32, #tpu.memory_space<vmem>>, %arg12: memref<8x290xf32, #tpu.memory_space<vmem>>, %arg13: memref<72x256xbf16, #tpu.memory_space<vmem>>, %arg14: memref<4x290xf32, #tpu.memory_space<vmem>>, %arg15: memref<36x256xbf16, #tpu.memory_space<vmem>>) attributes {dimension_semantics = [#tpu.dimension_semantics<parallel>], iteration_bounds = array<i64: 2>, scalar_prefetch = 0 : i64, scratch_operands = 4 : i64, tpu.core_type = #tpu.core_type<tc>, window_params = [{transform_indices = @transform_0, window_bounds = array<i64: 1, 4, 256>}, {transform_indices = @transform_1, window_bounds = array<i64: 1, 8, 64>}, {pipeline_mode = #tpu.pipeline_mode<synchronous>, transform_indices = @transform_2, window_bounds = array<i64: 8, 16>}, {pipeline_mode = #tpu.pipeline_mode<synchronous>, transform_indices = @transform_3, window_bounds = array<i64: 2, 256>}, {pipeline_mode = #tpu.pipeline_mode<synchronous>, transform_indices = @transform_4, window_bounds = array<i64: 4, 8>}, {pipeline_mode = #tpu.pipeline_mode<synchronous>, transform_indices = @transform_5, window_bounds = array<i64: 4, 1>}, {pipeline_mode = #tpu.pipeline_mode<synchronous>, transform_indices = @transform_6, window_bounds = array<i64: 4, 72>}, {pipeline_mode = #tpu.pipeline_mode<synchronous>, transform_indices = @transform_7, window_bounds = array<i64: 4, 1>}, {pipeline_mode = #tpu.pipeline_mode<synchronous>, transform_indices = @transform_8, window_bounds = array<i64: 4, 36>}, {pipeline_mode = #tpu.pipeline_mode<synchronous>, transform_indices = @transform_9, window_bounds = array<i64: 4, 1>}, {transform_indices = @transform_10, window_bounds = array<i64: 1, 4, 256>}]} {
    %cst = arith.constant 0.000000e+00 : f32
    %0 = vector.broadcast %cst : f32 to vector<8x17xf32>
    %c0 = arith.constant 0 : index
    %c0_0 = arith.constant 0 : index
    %1 = vector.load %arg12[%c0, %c0_0] : memref<8x290xf32, #tpu.memory_space<vmem>>, vector<8x17xf32>
    tpu.vector_store %arg12[%c0, %c0_0], %0 {strides = array<i32>} : memref<8x290xf32, #tpu.memory_space<vmem>>, vector<8x17xf32>,
    %cst_1 = arith.constant 0.000000e+00 : f32
    %2 = vector.broadcast %cst_1 : f32 to vector<8x17xf32>
    %c0_2 = arith.constant 0 : index
    %c273 = arith.constant 273 : index
    %3 = vector.load %arg12[%c0_2, %c273] : memref<8x290xf32, #tpu.memory_space<vmem>>, vector<8x17xf32>
    tpu.vector_store %arg12[%c0_2, %c273], %2 {strides = array<i32>} : memref<8x290xf32, #tpu.memory_space<vmem>>, vector<8x17xf32>,
    %cst_3 = arith.constant 0.000000e+00 : f32
    %4 = vector.broadcast %cst_3 : f32 to vector<4x17xf32>
    %c0_4 = arith.constant 0 : index
    %c0_5 = arith.constant 0 : index
    %5 = vector.load %arg14[%c0_4, %c0_5] : memref<4x290xf32, #tpu.memory_space<vmem>>, vector<4x17xf32>
    tpu.vector_store %arg14[%c0_4, %c0_5], %4 {strides = array<i32>} : memref<4x290xf32, #tpu.memory_space<vmem>>, vector<4x17xf32>,
    %cst_6 = arith.constant 0.000000e+00 : f32
    %6 = vector.broadcast %cst_6 : f32 to vector<4x17xf32>
    %c0_7 = arith.constant 0 : index
    %c273_8 = arith.constant 273 : index
    %7 = vector.load %arg14[%c0_7, %c273_8] : memref<4x290xf32, #tpu.memory_space<vmem>>, vector<4x17xf32>
    tpu.vector_store %arg14[%c0_7, %c273_8], %6 {strides = array<i32>} : memref<4x290xf32, #tpu.memory_space<vmem>>, vector<4x17xf32>,
    %c0_9 = arith.constant 0 : index
    %c0_10 = arith.constant 0 : index
    %8 = vector.load %arg5[%c0_9, %c0_10] : memref<4x8xbf16, #tpu.memory_space<vmem>>, vector<4x8xbf16>
    %c0_11 = arith.constant 0 : index
    %c0_12 = arith.constant 0 : index
    %c0_13 = arith.constant 0 : index
    %9 = vector.load %arg2[%c0_11, %c0_12, %c0_13] : memref<1x8x64xf32, #tpu.memory_space<vmem>>, vector<1x8x64xf32>
    %10 = vector.shape_cast %9 : vector<1x8x64xf32> to vector<8x64xf32>
    %11 = arith.truncf %10 : vector<8x64xf32> to vector<8x64xbf16>
    %cst_14 = arith.constant dense<0.000000e+00> : vector<4x64xf32>
    %12 = tpu.matmul %8, %11, %cst_14 {dimension_numbers = #tpu.dot_dimension_numbers<[1], [0], [0], [1], [0, 0, 1, 1], [], []>} : vector<4x8xbf16>, vector<8x64xbf16>, vector<4x64xf32> -> vector<4x64xf32>
    %c0_15 = arith.constant 0 : index
    %c0_16 = arith.constant 0 : index
    %13 = vector.load %arg6[%c0_15, %c0_16] : memref<4x1xf32, #tpu.memory_space<vmem>>, vector<4x1xf32>
    %14 = vector.broadcast %13 : vector<4x1xf32> to vector<4x64xf32>
    %15 = arith.addf %12, %14 : vector<4x64xf32>
    %16 = vector.extract_strided_slice %15 {offsets = [0, 0], sizes = [4, 8], strides = [1, 1]} : vector<4x64xf32> to vector<4x8xf32>
    %17 = arith.truncf %16 : vector<4x8xf32> to vector<4x8xbf16>
    %c0_17 = arith.constant 0 : index
    %c0_18 = arith.constant 0 : index
    %18 = vector.load %arg3[%c0_17, %c0_18] : memref<8x16xbf16, #tpu.memory_space<vmem>>, vector<8x16xbf16>
    %cst_19 = arith.constant dense<0.000000e+00> : vector<4x16xf32>
    %19 = tpu.matmul %17, %18, %cst_19 {dimension_numbers = #tpu.dot_dimension_numbers<[1], [0], [0], [1], [0, 0, 1, 1], [], []>} : vector<4x8xbf16>, vector<8x16xbf16>, vector<4x16xf32> -> vector<4x16xf32>
    %20 = vector.extract_strided_slice %15 {offsets = [0, 8], sizes = [4, 8], strides = [1, 1]} : vector<4x64xf32> to vector<4x8xf32>
    %21 = arith.truncf %20 : vector<4x8xf32> to vector<4x8xbf16>
    %c0_20 = arith.constant 0 : index
    %c0_21 = arith.constant 0 : index
    %22 = vector.load %arg3[%c0_20, %c0_21] : memref<8x16xbf16, #tpu.memory_space<vmem>>, vector<8x16xbf16>
    %cst_22 = arith.constant dense<0.000000e+00> : vector<4x16xf32>
    %23 = tpu.matmul %21, %22, %cst_22 {dimension_numbers = #tpu.dot_dimension_numbers<[1], [0], [0], [1], [0, 0, 1, 1], [], []>} : vector<4x8xbf16>, vector<8x16xbf16>, vector<4x16xf32> -> vector<4x16xf32>
    %24 = vector.extract_strided_slice %15 {offsets = [0, 16], sizes = [4, 8], strides = [1, 1]} : vector<4x64xf32> to vector<4x8xf32>
    %25 = arith.truncf %24 : vector<4x8xf32> to vector<4x8xbf16>
    %c0_23 = arith.constant 0 : index
    %c0_24 = arith.constant 0 : index
    %26 = vector.load %arg3[%c0_23, %c0_24] : memref<8x16xbf16, #tpu.memory_space<vmem>>, vector<8x16xbf16>
    %cst_25 = arith.constant dense<0.000000e+00> : vector<4x16xf32>
    %27 = tpu.matmul %25, %26, %cst_25 {dimension_numbers = #tpu.dot_dimension_numbers<[1], [0], [0], [1], [0, 0, 1, 1], [], []>} : vector<4x8xbf16>, vector<8x16xbf16>, vector<4x16xf32> -> vector<4x16xf32>
    %28 = vector.extract_strided_slice %15 {offsets = [0, 24], sizes = [4, 8], strides = [1, 1]} : vector<4x64xf32> to vector<4x8xf32>
    %29 = arith.truncf %28 : vector<4x8xf32> to vector<4x8xbf16>
    %c0_26 = arith.constant 0 : index
    %c0_27 = arith.constant 0 : index
    %30 = vector.load %arg3[%c0_26, %c0_27] : memref<8x16xbf16, #tpu.memory_space<vmem>>, vector<8x16xbf16>
    %cst_28 = arith.constant dense<0.000000e+00> : vector<4x16xf32>
    %31 = tpu.matmul %29, %30, %cst_28 {dimension_numbers = #tpu.dot_dimension_numbers<[1], [0], [0], [1], [0, 0, 1, 1], [], []>} : vector<4x8xbf16>, vector<8x16xbf16>, vector<4x16xf32> -> vector<4x16xf32>
    %32 = vector.extract_strided_slice %15 {offsets = [0, 32], sizes = [4, 8], strides = [1, 1]} : vector<4x64xf32> to vector<4x8xf32>
    %33 = arith.truncf %32 : vector<4x8xf32> to vector<4x8xbf16>
    %c0_29 = arith.constant 0 : index
    %c0_30 = arith.constant 0 : index
    %34 = vector.load %arg3[%c0_29, %c0_30] : memref<8x16xbf16, #tpu.memory_space<vmem>>, vector<8x16xbf16>
    %cst_31 = arith.constant dense<0.000000e+00> : vector<4x16xf32>
    %35 = tpu.matmul %33, %34, %cst_31 {dimension_numbers = #tpu.dot_dimension_numbers<[1], [0], [0], [1], [0, 0, 1, 1], [], []>} : vector<4x8xbf16>, vector<8x16xbf16>, vector<4x16xf32> -> vector<4x16xf32>
    %36 = vector.extract_strided_slice %15 {offsets = [0, 40], sizes = [4, 8], strides = [1, 1]} : vector<4x64xf32> to vector<4x8xf32>
    %37 = arith.truncf %36 : vector<4x8xf32> to vector<4x8xbf16>
    %c0_32 = arith.constant 0 : index
    %c0_33 = arith.constant 0 : index
    %38 = vector.load %arg3[%c0_32, %c0_33] : memref<8x16xbf16, #tpu.memory_space<vmem>>, vector<8x16xbf16>
    %cst_34 = arith.constant dense<0.000000e+00> : vector<4x16xf32>
    %39 = tpu.matmul %37, %38, %cst_34 {dimension_numbers = #tpu.dot_dimension_numbers<[1], [0], [0], [1], [0, 0, 1, 1], [], []>} : vector<4x8xbf16>, vector<8x16xbf16>, vector<4x16xf32> -> vector<4x16xf32>
    %40 = vector.extract_strided_slice %15 {offsets = [0, 48], sizes = [4, 8], strides = [1, 1]} : vector<4x64xf32> to vector<4x8xf32>
    %41 = arith.truncf %40 : vector<4x8xf32> to vector<4x8xbf16>
    %c0_35 = arith.constant 0 : index
    %c0_36 = arith.constant 0 : index
    %42 = vector.load %arg3[%c0_35, %c0_36] : memref<8x16xbf16, #tpu.memory_space<vmem>>, vector<8x16xbf16>
    %cst_37 = arith.constant dense<0.000000e+00> : vector<4x16xf32>
    %43 = tpu.matmul %41, %42, %cst_37 {dimension_numbers = #tpu.dot_dimension_numbers<[1], [0], [0], [1], [0, 0, 1, 1], [], []>} : vector<4x8xbf16>, vector<8x16xbf16>, vector<4x16xf32> -> vector<4x16xf32>
    %44 = vector.extract_strided_slice %15 {offsets = [0, 56], sizes = [4, 8], strides = [1, 1]} : vector<4x64xf32> to vector<4x8xf32>
    %45 = arith.truncf %44 : vector<4x8xf32> to vector<4x8xbf16>
    %c0_38 = arith.constant 0 : index
    %c0_39 = arith.constant 0 : index
    %46 = vector.load %arg3[%c0_38, %c0_39] : memref<8x16xbf16, #tpu.memory_space<vmem>>, vector<8x16xbf16>
    %cst_40 = arith.constant dense<0.000000e+00> : vector<4x16xf32>
    %47 = tpu.matmul %45, %46, %cst_40 {dimension_numbers = #tpu.dot_dimension_numbers<[1], [0], [0], [1], [0, 0, 1, 1], [], []>} : vector<4x8xbf16>, vector<8x16xbf16>, vector<4x16xf32> -> vector<4x16xf32>
    %c0_41 = arith.constant 0 : index
    %c0_42 = arith.constant 0 : index
    %c0_43 = arith.constant 0 : index
    %48 = vector.load %arg1[%c0_41, %c0_42, %c0_43] : memref<1x4x256xf32, #tpu.memory_space<vmem>>, vector<1x4x256xf32>
    %49 = vector.shape_cast %48 : vector<1x4x256xf32> to vector<4x256xf32>
    %c0_44 = arith.constant 0 : index
    %c17 = arith.constant 17 : index
    %50 = vector.load %arg12[%c0_44, %c17] : memref<8x290xf32, #tpu.memory_space<vmem>>, vector<4x256xf32>
    tpu.vector_store %arg12[%c0_44, %c17], %49 {strides = array<i32>} : memref<8x290xf32, #tpu.memory_space<vmem>>, vector<4x256xf32>,
    %cst_45 = arith.constant 0.000000e+00 : f32
    %51 = vector.broadcast %cst_45 : f32 to vector<4x16xf32>
    %52 = arith.maximumf %19, %51 : vector<4x16xf32>
    %c4 = arith.constant 4 : index
    %c17_46 = arith.constant 17 : index
    %53 = vector.load %arg12[%c4, %c17_46] : memref<8x290xf32, #tpu.memory_space<vmem>>, vector<4x16xf32>
    tpu.vector_store %arg12[%c4, %c17_46], %52 {strides = array<i32>} : memref<8x290xf32, #tpu.memory_space<vmem>>, vector<4x16xf32>,
    %cst_47 = arith.constant 7.500000e-01 : f32
    %54 = vector.broadcast %cst_47 : f32 to vector<4x16xf32>
    %55 = arith.mulf %54, %19 : vector<4x16xf32>
    %cst_48 = arith.constant 2.500000e-01 : f32
    %56 = vector.broadcast %cst_48 : f32 to vector<4x16xf32>
    %57 = arith.mulf %56, %23 : vector<4x16xf32>
    %58 = arith.addf %55, %57 : vector<4x16xf32>
    %cst_49 = arith.constant 0.000000e+00 : f32
    %59 = vector.broadcast %cst_49 : f32 to vector<4x16xf32>
    %60 = arith.maximumf %58, %59 : vector<4x16xf32>
    %c4_50 = arith.constant 4 : index
    %c33 = arith.constant 33 : index
    %61 = vector.load %arg12[%c4_50, %c33] : memref<8x290xf32, #tpu.memory_space<vmem>>, vector<4x16xf32>
    tpu.vector_store %arg12[%c4_50, %c33], %60 {strides = array<i32>} : memref<8x290xf32, #tpu.memory_space<vmem>>, vector<4x16xf32>,
    %cst_51 = arith.constant 2.500000e-01 : f32
    %62 = vector.broadcast %cst_51 : f32 to vector<4x16xf32>
    %63 = arith.mulf %62, %19 : vector<4x16xf32>
    %cst_52 = arith.constant 7.500000e-01 : f32
    %64 = vector.broadcast %cst_52 : f32 to vector<4x16xf32>
    %65 = arith.mulf %64, %23 : vector<4x16xf32>
    %66 = arith.addf %63, %65 : vector<4x16xf32>
    %cst_53 = arith.constant 0.000000e+00 : f32
    %67 = vector.broadcast %cst_53 : f32 to vector<4x16xf32>
    %68 = arith.maximumf %66, %67 : vector<4x16xf32>
    %c4_54 = arith.constant 4 : index
    %c49 = arith.constant 49 : index
    %69 = vector.load %arg12[%c4_54, %c49] : memref<8x290xf32, #tpu.memory_space<vmem>>, vector<4x16xf32>
    tpu.vector_store %arg12[%c4_54, %c49], %68 {strides = array<i32>} : memref<8x290xf32, #tpu.memory_space<vmem>>, vector<4x16xf32>,
    %cst_55 = arith.constant 7.500000e-01 : f32
    %70 = vector.broadcast %cst_55 : f32 to vector<4x16xf32>
    %71 = arith.mulf %70, %23 : vector<4x16xf32>
    %cst_56 = arith.constant 2.500000e-01 : f32
    %72 = vector.broadcast %cst_56 : f32 to vector<4x16xf32>
    %73 = arith.mulf %72, %27 : vector<4x16xf32>
    %74 = arith.addf %71, %73 : vector<4x16xf32>
    %cst_57 = arith.constant 0.000000e+00 : f32
    %75 = vector.broadcast %cst_57 : f32 to vector<4x16xf32>
    %76 = arith.maximumf %74, %75 : vector<4x16xf32>
    %c4_58 = arith.constant 4 : index
    %c65 = arith.constant 65 : index
    %77 = vector.load %arg12[%c4_58, %c65] : memref<8x290xf32, #tpu.memory_space<vmem>>, vector<4x16xf32>
    tpu.vector_store %arg12[%c4_58, %c65], %76 {strides = array<i32>} : memref<8x290xf32, #tpu.memory_space<vmem>>, vector<4x16xf32>,
    %cst_59 = arith.constant 2.500000e-01 : f32
    %78 = vector.broadcast %cst_59 : f32 to vector<4x16xf32>
    %79 = arith.mulf %78, %23 : vector<4x16xf32>
    %cst_60 = arith.constant 7.500000e-01 : f32
    %80 = vector.broadcast %cst_60 : f32 to vector<4x16xf32>
    %81 = arith.mulf %80, %27 : vector<4x16xf32>
    %82 = arith.addf %79, %81 : vector<4x16xf32>
    %cst_61 = arith.constant 0.000000e+00 : f32
    %83 = vector.broadcast %cst_61 : f32 to vector<4x16xf32>
    %84 = arith.maximumf %82, %83 : vector<4x16xf32>
    %c4_62 = arith.constant 4 : index
    %c81 = arith.constant 81 : index
    %85 = vector.load %arg12[%c4_62, %c81] : memref<8x290xf32, #tpu.memory_space<vmem>>, vector<4x16xf32>
    tpu.vector_store %arg12[%c4_62, %c81], %84 {strides = array<i32>} : memref<8x290xf32, #tpu.memory_space<vmem>>, vector<4x16xf32>,
    %cst_63 = arith.constant 7.500000e-01 : f32
    %86 = vector.broadcast %cst_63 : f32 to vector<4x16xf32>
    %87 = arith.mulf %86, %27 : vector<4x16xf32>
    %cst_64 = arith.constant 2.500000e-01 : f32
    %88 = vector.broadcast %cst_64 : f32 to vector<4x16xf32>
    %89 = arith.mulf %88, %31 : vector<4x16xf32>
    %90 = arith.addf %87, %89 : vector<4x16xf32>
    %cst_65 = arith.constant 0.000000e+00 : f32
    %91 = vector.broadcast %cst_65 : f32 to vector<4x16xf32>
    %92 = arith.maximumf %90, %91 : vector<4x16xf32>
    %c4_66 = arith.constant 4 : index
    %c97 = arith.constant 97 : index
    %93 = vector.load %arg12[%c4_66, %c97] : memref<8x290xf32, #tpu.memory_space<vmem>>, vector<4x16xf32>
    tpu.vector_store %arg12[%c4_66, %c97], %92 {strides = array<i32>} : memref<8x290xf32, #tpu.memory_space<vmem>>, vector<4x16xf32>,
    %cst_67 = arith.constant 2.500000e-01 : f32
    %94 = vector.broadcast %cst_67 : f32 to vector<4x16xf32>
    %95 = arith.mulf %94, %27 : vector<4x16xf32>
    %cst_68 = arith.constant 7.500000e-01 : f32
    %96 = vector.broadcast %cst_68 : f32 to vector<4x16xf32>
    %97 = arith.mulf %96, %31 : vector<4x16xf32>
    %98 = arith.addf %95, %97 : vector<4x16xf32>
    %cst_69 = arith.constant 0.000000e+00 : f32
    %99 = vector.broadcast %cst_69 : f32 to vector<4x16xf32>
    %100 = arith.maximumf %98, %99 : vector<4x16xf32>
    %c4_70 = arith.constant 4 : index
    %c113 = arith.constant 113 : index
    %101 = vector.load %arg12[%c4_70, %c113] : memref<8x290xf32, #tpu.memory_space<vmem>>, vector<4x16xf32>
    tpu.vector_store %arg12[%c4_70, %c113], %100 {strides = array<i32>} : memref<8x290xf32, #tpu.memory_space<vmem>>, vector<4x16xf32>,
    %cst_71 = arith.constant 7.500000e-01 : f32
    %102 = vector.broadcast %cst_71 : f32 to vector<4x16xf32>
    %103 = arith.mulf %102, %31 : vector<4x16xf32>
    %cst_72 = arith.constant 2.500000e-01 : f32
    %104 = vector.broadcast %cst_72 : f32 to vector<4x16xf32>
    %105 = arith.mulf %104, %35 : vector<4x16xf32>
    %106 = arith.addf %103, %105 : vector<4x16xf32>
    %cst_73 = arith.constant 0.000000e+00 : f32
    %107 = vector.broadcast %cst_73 : f32 to vector<4x16xf32>
    %108 = arith.maximumf %106, %107 : vector<4x16xf32>
    %c4_74 = arith.constant 4 : index
    %c129 = arith.constant 129 : index
    %109 = vector.load %arg12[%c4_74, %c129] : memref<8x290xf32, #tpu.memory_space<vmem>>, vector<4x16xf32>
    tpu.vector_store %arg12[%c4_74, %c129], %108 {strides = array<i32>} : memref<8x290xf32, #tpu.memory_space<vmem>>, vector<4x16xf32>,
    %cst_75 = arith.constant 2.500000e-01 : f32
    %110 = vector.broadcast %cst_75 : f32 to vector<4x16xf32>
    %111 = arith.mulf %110, %31 : vector<4x16xf32>
    %cst_76 = arith.constant 7.500000e-01 : f32
    %112 = vector.broadcast %cst_76 : f32 to vector<4x16xf32>
    %113 = arith.mulf %112, %35 : vector<4x16xf32>
    %114 = arith.addf %111, %113 : vector<4x16xf32>
    %cst_77 = arith.constant 0.000000e+00 : f32
    %115 = vector.broadcast %cst_77 : f32 to vector<4x16xf32>
    %116 = arith.maximumf %114, %115 : vector<4x16xf32>
    %c4_78 = arith.constant 4 : index
    %c145 = arith.constant 145 : index
    %117 = vector.load %arg12[%c4_78, %c145] : memref<8x290xf32, #tpu.memory_space<vmem>>, vector<4x16xf32>
    tpu.vector_store %arg12[%c4_78, %c145], %116 {strides = array<i32>} : memref<8x290xf32, #tpu.memory_space<vmem>>, vector<4x16xf32>,
    %cst_79 = arith.constant 7.500000e-01 : f32
    %118 = vector.broadcast %cst_79 : f32 to vector<4x16xf32>
    %119 = arith.mulf %118, %35 : vector<4x16xf32>
    %cst_80 = arith.constant 2.500000e-01 : f32
    %120 = vector.broadcast %cst_80 : f32 to vector<4x16xf32>
    %121 = arith.mulf %120, %39 : vector<4x16xf32>
    %122 = arith.addf %119, %121 : vector<4x16xf32>
    %cst_81 = arith.constant 0.000000e+00 : f32
    %123 = vector.broadcast %cst_81 : f32 to vector<4x16xf32>
    %124 = arith.maximumf %122, %123 : vector<4x16xf32>
    %c4_82 = arith.constant 4 : index
    %c161 = arith.constant 161 : index
    %125 = vector.load %arg12[%c4_82, %c161] : memref<8x290xf32, #tpu.memory_space<vmem>>, vector<4x16xf32>
    tpu.vector_store %arg12[%c4_82, %c161], %124 {strides = array<i32>} : memref<8x290xf32, #tpu.memory_space<vmem>>, vector<4x16xf32>,
    %cst_83 = arith.constant 2.500000e-01 : f32
    %126 = vector.broadcast %cst_83 : f32 to vector<4x16xf32>
    %127 = arith.mulf %126, %35 : vector<4x16xf32>
    %cst_84 = arith.constant 7.500000e-01 : f32
    %128 = vector.broadcast %cst_84 : f32 to vector<4x16xf32>
    %129 = arith.mulf %128, %39 : vector<4x16xf32>
    %130 = arith.addf %127, %129 : vector<4x16xf32>
    %cst_85 = arith.constant 0.000000e+00 : f32
    %131 = vector.broadcast %cst_85 : f32 to vector<4x16xf32>
    %132 = arith.maximumf %130, %131 : vector<4x16xf32>
    %c4_86 = arith.constant 4 : index
    %c177 = arith.constant 177 : index
    %133 = vector.load %arg12[%c4_86, %c177] : memref<8x290xf32, #tpu.memory_space<vmem>>, vector<4x16xf32>
    tpu.vector_store %arg12[%c4_86, %c177], %132 {strides = array<i32>} : memref<8x290xf32, #tpu.memory_space<vmem>>, vector<4x16xf32>,
    %cst_87 = arith.constant 7.500000e-01 : f32
    %134 = vector.broadcast %cst_87 : f32 to vector<4x16xf32>
    %135 = arith.mulf %134, %39 : vector<4x16xf32>
    %cst_88 = arith.constant 2.500000e-01 : f32
    %136 = vector.broadcast %cst_88 : f32 to vector<4x16xf32>
    %137 = arith.mulf %136, %43 : vector<4x16xf32>
    %138 = arith.addf %135, %137 : vector<4x16xf32>
    %cst_89 = arith.constant 0.000000e+00 : f32
    %139 = vector.broadcast %cst_89 : f32 to vector<4x16xf32>
    %140 = arith.maximumf %138, %139 : vector<4x16xf32>
    %c4_90 = arith.constant 4 : index
    %c193 = arith.constant 193 : index
    %141 = vector.load %arg12[%c4_90, %c193] : memref<8x290xf32, #tpu.memory_space<vmem>>, vector<4x16xf32>
    tpu.vector_store %arg12[%c4_90, %c193], %140 {strides = array<i32>} : memref<8x290xf32, #tpu.memory_space<vmem>>, vector<4x16xf32>,
    %cst_91 = arith.constant 2.500000e-01 : f32
    %142 = vector.broadcast %cst_91 : f32 to vector<4x16xf32>
    %143 = arith.mulf %142, %39 : vector<4x16xf32>
    %cst_92 = arith.constant 7.500000e-01 : f32
    %144 = vector.broadcast %cst_92 : f32 to vector<4x16xf32>
    %145 = arith.mulf %144, %43 : vector<4x16xf32>
    %146 = arith.addf %143, %145 : vector<4x16xf32>
    %cst_93 = arith.constant 0.000000e+00 : f32
    %147 = vector.broadcast %cst_93 : f32 to vector<4x16xf32>
    %148 = arith.maximumf %146, %147 : vector<4x16xf32>
    %c4_94 = arith.constant 4 : index
    %c209 = arith.constant 209 : index
    %149 = vector.load %arg12[%c4_94, %c209] : memref<8x290xf32, #tpu.memory_space<vmem>>, vector<4x16xf32>
    tpu.vector_store %arg12[%c4_94, %c209], %148 {strides = array<i32>} : memref<8x290xf32, #tpu.memory_space<vmem>>, vector<4x16xf32>,
    %cst_95 = arith.constant 7.500000e-01 : f32
    %150 = vector.broadcast %cst_95 : f32 to vector<4x16xf32>
    %151 = arith.mulf %150, %43 : vector<4x16xf32>
    %cst_96 = arith.constant 2.500000e-01 : f32
    %152 = vector.broadcast %cst_96 : f32 to vector<4x16xf32>
    %153 = arith.mulf %152, %47 : vector<4x16xf32>
    %154 = arith.addf %151, %153 : vector<4x16xf32>
    %cst_97 = arith.constant 0.000000e+00 : f32
    %155 = vector.broadcast %cst_97 : f32 to vector<4x16xf32>
    %156 = arith.maximumf %154, %155 : vector<4x16xf32>
    %c4_98 = arith.constant 4 : index
    %c225 = arith.constant 225 : index
    %157 = vector.load %arg12[%c4_98, %c225] : memref<8x290xf32, #tpu.memory_space<vmem>>, vector<4x16xf32>
    tpu.vector_store %arg12[%c4_98, %c225], %156 {strides = array<i32>} : memref<8x290xf32, #tpu.memory_space<vmem>>, vector<4x16xf32>,
    %cst_99 = arith.constant 2.500000e-01 : f32
    %158 = vector.broadcast %cst_99 : f32 to vector<4x16xf32>
    %159 = arith.mulf %158, %43 : vector<4x16xf32>
    %cst_100 = arith.constant 7.500000e-01 : f32
    %160 = vector.broadcast %cst_100 : f32 to vector<4x16xf32>
    %161 = arith.mulf %160, %47 : vector<4x16xf32>
    %162 = arith.addf %159, %161 : vector<4x16xf32>
    %cst_101 = arith.constant 0.000000e+00 : f32
    %163 = vector.broadcast %cst_101 : f32 to vector<4x16xf32>
    %164 = arith.maximumf %162, %163 : vector<4x16xf32>
    %c4_102 = arith.constant 4 : index
    %c241 = arith.constant 241 : index
    %165 = vector.load %arg12[%c4_102, %c241] : memref<8x290xf32, #tpu.memory_space<vmem>>, vector<4x16xf32>
    tpu.vector_store %arg12[%c4_102, %c241], %164 {strides = array<i32>} : memref<8x290xf32, #tpu.memory_space<vmem>>, vector<4x16xf32>,
    %cst_103 = arith.constant 0.000000e+00 : f32
    %166 = vector.broadcast %cst_103 : f32 to vector<4x16xf32>
    %167 = arith.maximumf %47, %166 : vector<4x16xf32>
    %c4_104 = arith.constant 4 : index
    %c257 = arith.constant 257 : index
    %168 = vector.load %arg12[%c4_104, %c257] : memref<8x290xf32, #tpu.memory_space<vmem>>, vector<4x16xf32>
    tpu.vector_store %arg12[%c4_104, %c257], %167 {strides = array<i32>} : memref<8x290xf32, #tpu.memory_space<vmem>>, vector<4x16xf32>,
    %c0_105 = arith.constant 0 : index
    %c0_106 = arith.constant 0 : index
    %169 = vector.load %arg12[%c0_105, %c0_106] : memref<8x290xf32, #tpu.memory_space<vmem>>, vector<8x256xf32>
    %c0_107 = arith.constant 0 : index
    %c0_108 = arith.constant 0 : index
    %170 = vector.load %arg4[%c0_107, %c0_108] : memref<2x256xf32, #tpu.memory_space<vmem>>, vector<1x256xf32>
    %171 = vector.broadcast %170 : vector<1x256xf32> to vector<8x256xf32>
    %172 = arith.mulf %169, %171 : vector<8x256xf32>
    %173 = arith.truncf %172 : vector<8x256xf32> to vector<8x256xbf16>
    %c0_109 = arith.constant 0 : index
    %c0_110 = arith.constant 0 : index
    %174 = vector.load %arg13[%c0_109, %c0_110] : memref<72x256xbf16, #tpu.memory_space<vmem>>, vector<8x256xbf16>
    tpu.vector_store %arg13[%c0_109, %c0_110], %173 {strides = array<i32>} : memref<72x256xbf16, #tpu.memory_space<vmem>>, vector<8x256xbf16>,
    %c0_111 = arith.constant 0 : index
    %c1 = arith.constant 1 : index
    %175 = vector.load %arg12[%c0_111, %c1] : memref<8x290xf32, #tpu.memory_space<vmem>>, vector<8x256xf32>
    %176 = arith.truncf %175 : vector<8x256xf32> to vector<8x256xbf16>
    %c8 = arith.constant 8 : index
    %c0_112 = arith.constant 0 : index
    %177 = vector.load %arg13[%c8, %c0_112] : memref<72x256xbf16, #tpu.memory_space<vmem>>, vector<8x256xbf16>
    tpu.vector_store %arg13[%c8, %c0_112], %176 {strides = array<i32>} : memref<72x256xbf16, #tpu.memory_space<vmem>>, vector<8x256xbf16>,
    %c0_113 = arith.constant 0 : index
    %c2 = arith.constant 2 : index
    %178 = vector.load %arg12[%c0_113, %c2] : memref<8x290xf32, #tpu.memory_space<vmem>>, vector<8x256xf32>
    %c1_114 = arith.constant 1 : index
    %c0_115 = arith.constant 0 : index
    %179 = vector.load %arg4[%c1_114, %c0_115] : memref<2x256xf32, #tpu.memory_space<vmem>>, vector<1x256xf32>
    %180 = vector.broadcast %179 : vector<1x256xf32> to vector<8x256xf32>
    %181 = arith.mulf %178, %180 : vector<8x256xf32>
    %182 = arith.truncf %181 : vector<8x256xf32> to vector<8x256xbf16>
    %c16 = arith.constant 16 : index
    %c0_116 = arith.constant 0 : index
    %183 = vector.load %arg13[%c16, %c0_116] : memref<72x256xbf16, #tpu.memory_space<vmem>>, vector<8x256xbf16>
    tpu.vector_store %arg13[%c16, %c0_116], %182 {strides = array<i32>} : memref<72x256xbf16, #tpu.memory_space<vmem>>, vector<8x256xbf16>,
    %c0_117 = arith.constant 0 : index
    %c16_118 = arith.constant 16 : index
    %184 = vector.load %arg12[%c0_117, %c16_118] : memref<8x290xf32, #tpu.memory_space<vmem>>, vector<8x256xf32>
    %c0_119 = arith.constant 0 : index
    %c0_120 = arith.constant 0 : index
    %185 = vector.load %arg4[%c0_119, %c0_120] : memref<2x256xf32, #tpu.memory_space<vmem>>, vector<1x256xf32>
    %186 = vector.broadcast %185 : vector<1x256xf32> to vector<8x256xf32>
    %187 = arith.mulf %184, %186 : vector<8x256xf32>
    %188 = arith.truncf %187 : vector<8x256xf32> to vector<8x256xbf16>
    %c24 = arith.constant 24 : index
    %c0_121 = arith.constant 0 : index
    %189 = vector.load %arg13[%c24, %c0_121] : memref<72x256xbf16, #tpu.memory_space<vmem>>, vector<8x256xbf16>
    tpu.vector_store %arg13[%c24, %c0_121], %188 {strides = array<i32>} : memref<72x256xbf16, #tpu.memory_space<vmem>>, vector<8x256xbf16>,
    %c0_122 = arith.constant 0 : index
    %c17_123 = arith.constant 17 : index
    %190 = vector.load %arg12[%c0_122, %c17_123] : memref<8x290xf32, #tpu.memory_space<vmem>>, vector<8x256xf32>
    %191 = arith.truncf %190 : vector<8x256xf32> to vector<8x256xbf16>
    %c32 = arith.constant 32 : index
    %c0_124 = arith.constant 0 : index
    %192 = vector.load %arg13[%c32, %c0_124] : memref<72x256xbf16, #tpu.memory_space<vmem>>, vector<8x256xbf16>
    tpu.vector_store %arg13[%c32, %c0_124], %191 {strides = array<i32>} : memref<72x256xbf16, #tpu.memory_space<vmem>>, vector<8x256xbf16>,
    %c0_125 = arith.constant 0 : index
    %c18 = arith.constant 18 : index
    %193 = vector.load %arg12[%c0_125, %c18] : memref<8x290xf32, #tpu.memory_space<vmem>>, vector<8x256xf32>
    %c1_126 = arith.constant 1 : index
    %c0_127 = arith.constant 0 : index
    %194 = vector.load %arg4[%c1_126, %c0_127] : memref<2x256xf32, #tpu.memory_space<vmem>>, vector<1x256xf32>
    %195 = vector.broadcast %194 : vector<1x256xf32> to vector<8x256xf32>
    %196 = arith.mulf %193, %195 : vector<8x256xf32>
    %197 = arith.truncf %196 : vector<8x256xf32> to vector<8x256xbf16>
    %c40 = arith.constant 40 : index
    %c0_128 = arith.constant 0 : index
    %198 = vector.load %arg13[%c40, %c0_128] : memref<72x256xbf16, #tpu.memory_space<vmem>>, vector<8x256xbf16>
    tpu.vector_store %arg13[%c40, %c0_128], %197 {strides = array<i32>} : memref<72x256xbf16, #tpu.memory_space<vmem>>, vector<8x256xbf16>,
    %c0_129 = arith.constant 0 : index
    %c32_130 = arith.constant 32 : index
    %199 = vector.load %arg12[%c0_129, %c32_130] : memref<8x290xf32, #tpu.memory_space<vmem>>, vector<8x256xf32>
    %c0_131 = arith.constant 0 : index
    %c0_132 = arith.constant 0 : index
    %200 = vector.load %arg4[%c0_131, %c0_132] : memref<2x256xf32, #tpu.memory_space<vmem>>, vector<1x256xf32>
    %201 = vector.broadcast %200 : vector<1x256xf32> to vector<8x256xf32>
    %202 = arith.mulf %199, %201 : vector<8x256xf32>
    %203 = arith.truncf %202 : vector<8x256xf32> to vector<8x256xbf16>
    %c48 = arith.constant 48 : index
    %c0_133 = arith.constant 0 : index
    %204 = vector.load %arg13[%c48, %c0_133] : memref<72x256xbf16, #tpu.memory_space<vmem>>, vector<8x256xbf16>
    tpu.vector_store %arg13[%c48, %c0_133], %203 {strides = array<i32>} : memref<72x256xbf16, #tpu.memory_space<vmem>>, vector<8x256xbf16>,
    %c0_134 = arith.constant 0 : index
    %c33_135 = arith.constant 33 : index
    %205 = vector.load %arg12[%c0_134, %c33_135] : memref<8x290xf32, #tpu.memory_space<vmem>>, vector<8x256xf32>
    %206 = arith.truncf %205 : vector<8x256xf32> to vector<8x256xbf16>
    %c56 = arith.constant 56 : index
    %c0_136 = arith.constant 0 : index
    %207 = vector.load %arg13[%c56, %c0_136] : memref<72x256xbf16, #tpu.memory_space<vmem>>, vector<8x256xbf16>
    tpu.vector_store %arg13[%c56, %c0_136], %206 {strides = array<i32>} : memref<72x256xbf16, #tpu.memory_space<vmem>>, vector<8x256xbf16>,
    %c0_137 = arith.constant 0 : index
    %c34 = arith.constant 34 : index
    %208 = vector.load %arg12[%c0_137, %c34] : memref<8x290xf32, #tpu.memory_space<vmem>>, vector<8x256xf32>
    %c1_138 = arith.constant 1 : index
    %c0_139 = arith.constant 0 : index
    %209 = vector.load %arg4[%c1_138, %c0_139] : memref<2x256xf32, #tpu.memory_space<vmem>>, vector<1x256xf32>
    %210 = vector.broadcast %209 : vector<1x256xf32> to vector<8x256xf32>
    %211 = arith.mulf %208, %210 : vector<8x256xf32>
    %212 = arith.truncf %211 : vector<8x256xf32> to vector<8x256xbf16>
    %c64 = arith.constant 64 : index
    %c0_140 = arith.constant 0 : index
    %213 = vector.load %arg13[%c64, %c0_140] : memref<72x256xbf16, #tpu.memory_space<vmem>>, vector<8x256xbf16>
    tpu.vector_store %arg13[%c64, %c0_140], %212 {strides = array<i32>} : memref<72x256xbf16, #tpu.memory_space<vmem>>, vector<8x256xbf16>,
    %c0_141 = arith.constant 0 : index
    %c0_142 = arith.constant 0 : index
    %214 = vector.load %arg7[%c0_141, %c0_142] : memref<4x72xbf16, #tpu.memory_space<vmem>>, vector<4x72xbf16>
    %c0_143 = arith.constant 0 : index
    %c0_144 = arith.constant 0 : index
    %215 = vector.load %arg13[%c0_143, %c0_144] : memref<72x256xbf16, #tpu.memory_space<vmem>>, vector<72x256xbf16>
    %cst_145 = arith.constant dense<0.000000e+00> : vector<4x256xf32>
    %216 = tpu.matmul %214, %215, %cst_145 {dimension_numbers = #tpu.dot_dimension_numbers<[1], [0], [0], [1], [0, 0, 1, 1], [], []>} : vector<4x72xbf16>, vector<72x256xbf16>, vector<4x256xf32> -> vector<4x256xf32>
    %c0_146 = arith.constant 0 : index
    %c0_147 = arith.constant 0 : index
    %217 = vector.load %arg8[%c0_146, %c0_147] : memref<4x1xf32, #tpu.memory_space<vmem>>, vector<4x1xf32>
    %218 = vector.broadcast %217 : vector<4x1xf32> to vector<4x256xf32>
    %219 = arith.addf %216, %218 : vector<4x256xf32>
    %cst_148 = arith.constant 0.000000e+00 : f32
    %220 = vector.broadcast %cst_148 : f32 to vector<4x256xf32>
    %221 = arith.maximumf %219, %220 : vector<4x256xf32>
    %c0_149 = arith.constant 0 : index
    %c17_150 = arith.constant 17 : index
    %222 = vector.load %arg14[%c0_149, %c17_150] : memref<4x290xf32, #tpu.memory_space<vmem>>, vector<4x256xf32>
    tpu.vector_store %arg14[%c0_149, %c17_150], %221 {strides = array<i32>} : memref<4x290xf32, #tpu.memory_space<vmem>>, vector<4x256xf32>,
    %c0_151 = arith.constant 0 : index
    %c0_152 = arith.constant 0 : index
    %223 = vector.load %arg14[%c0_151, %c0_152] : memref<4x290xf32, #tpu.memory_space<vmem>>, vector<4x256xf32>
    %c0_153 = arith.constant 0 : index
    %c0_154 = arith.constant 0 : index
    %224 = vector.load %arg4[%c0_153, %c0_154] : memref<2x256xf32, #tpu.memory_space<vmem>>, vector<1x256xf32>
    %225 = vector.broadcast %224 : vector<1x256xf32> to vector<4x256xf32>
    %226 = arith.mulf %223, %225 : vector<4x256xf32>
    %227 = arith.truncf %226 : vector<4x256xf32> to vector<4x256xbf16>
    %c0_155 = arith.constant 0 : index
    %c0_156 = arith.constant 0 : index
    %228 = vector.load %arg15[%c0_155, %c0_156] : memref<36x256xbf16, #tpu.memory_space<vmem>>, vector<4x256xbf16>
    tpu.vector_store %arg15[%c0_155, %c0_156], %227 {strides = array<i32>} : memref<36x256xbf16, #tpu.memory_space<vmem>>, vector<4x256xbf16>,
    %c0_157 = arith.constant 0 : index
    %c1_158 = arith.constant 1 : index
    %229 = vector.load %arg14[%c0_157, %c1_158] : memref<4x290xf32, #tpu.memory_space<vmem>>, vector<4x256xf32>
    %230 = arith.truncf %229 : vector<4x256xf32> to vector<4x256xbf16>
    %c4_159 = arith.constant 4 : index
    %c0_160 = arith.constant 0 : index
    %231 = vector.load %arg15[%c4_159, %c0_160] : memref<36x256xbf16, #tpu.memory_space<vmem>>, vector<4x256xbf16>
    tpu.vector_store %arg15[%c4_159, %c0_160], %230 {strides = array<i32>} : memref<36x256xbf16, #tpu.memory_space<vmem>>, vector<4x256xbf16>,
    %c0_161 = arith.constant 0 : index
    %c2_162 = arith.constant 2 : index
    %232 = vector.load %arg14[%c0_161, %c2_162] : memref<4x290xf32, #tpu.memory_space<vmem>>, vector<4x256xf32>
    %c1_163 = arith.constant 1 : index
    %c0_164 = arith.constant 0 : index
    %233 = vector.load %arg4[%c1_163, %c0_164] : memref<2x256xf32, #tpu.memory_space<vmem>>, vector<1x256xf32>
    %234 = vector.broadcast %233 : vector<1x256xf32> to vector<4x256xf32>
    %235 = arith.mulf %232, %234 : vector<4x256xf32>
    %236 = arith.truncf %235 : vector<4x256xf32> to vector<4x256xbf16>
    %c8_165 = arith.constant 8 : index
    %c0_166 = arith.constant 0 : index
    %237 = vector.load %arg15[%c8_165, %c0_166] : memref<36x256xbf16, #tpu.memory_space<vmem>>, vector<4x256xbf16>
    tpu.vector_store %arg15[%c8_165, %c0_166], %236 {strides = array<i32>} : memref<36x256xbf16, #tpu.memory_space<vmem>>, vector<4x256xbf16>,
    %c0_167 = arith.constant 0 : index
    %c16_168 = arith.constant 16 : index
    %238 = vector.load %arg14[%c0_167, %c16_168] : memref<4x290xf32, #tpu.memory_space<vmem>>, vector<4x256xf32>
    %c0_169 = arith.constant 0 : index
    %c0_170 = arith.constant 0 : index
    %239 = vector.load %arg4[%c0_169, %c0_170] : memref<2x256xf32, #tpu.memory_space<vmem>>, vector<1x256xf32>
    %240 = vector.broadcast %239 : vector<1x256xf32> to vector<4x256xf32>
    %241 = arith.mulf %238, %240 : vector<4x256xf32>
    %242 = arith.truncf %241 : vector<4x256xf32> to vector<4x256xbf16>
    %c12 = arith.constant 12 : index
    %c0_171 = arith.constant 0 : index
    %243 = vector.load %arg15[%c12, %c0_171] : memref<36x256xbf16, #tpu.memory_space<vmem>>, vector<4x256xbf16>
    tpu.vector_store %arg15[%c12, %c0_171], %242 {strides = array<i32>} : memref<36x256xbf16, #tpu.memory_space<vmem>>, vector<4x256xbf16>,
    %c0_172 = arith.constant 0 : index
    %c17_173 = arith.constant 17 : index
    %244 = vector.load %arg14[%c0_172, %c17_173] : memref<4x290xf32, #tpu.memory_space<vmem>>, vector<4x256xf32>
    %245 = arith.truncf %244 : vector<4x256xf32> to vector<4x256xbf16>
    %c16_174 = arith.constant 16 : index
    %c0_175 = arith.constant 0 : index
    %246 = vector.load %arg15[%c16_174, %c0_175] : memref<36x256xbf16, #tpu.memory_space<vmem>>, vector<4x256xbf16>
    tpu.vector_store %arg15[%c16_174, %c0_175], %245 {strides = array<i32>} : memref<36x256xbf16, #tpu.memory_space<vmem>>, vector<4x256xbf16>,
    %c0_176 = arith.constant 0 : index
    %c18_177 = arith.constant 18 : index
    %247 = vector.load %arg14[%c0_176, %c18_177] : memref<4x290xf32, #tpu.memory_space<vmem>>, vector<4x256xf32>
    %c1_178 = arith.constant 1 : index
    %c0_179 = arith.constant 0 : index
    %248 = vector.load %arg4[%c1_178, %c0_179] : memref<2x256xf32, #tpu.memory_space<vmem>>, vector<1x256xf32>
    %249 = vector.broadcast %248 : vector<1x256xf32> to vector<4x256xf32>
    %250 = arith.mulf %247, %249 : vector<4x256xf32>
    %251 = arith.truncf %250 : vector<4x256xf32> to vector<4x256xbf16>
    %c20 = arith.constant 20 : index
    %c0_180 = arith.constant 0 : index
    %252 = vector.load %arg15[%c20, %c0_180] : memref<36x256xbf16, #tpu.memory_space<vmem>>, vector<4x256xbf16>
    tpu.vector_store %arg15[%c20, %c0_180], %251 {strides = array<i32>} : memref<36x256xbf16, #tpu.memory_space<vmem>>, vector<4x256xbf16>,
    %c0_181 = arith.constant 0 : index
    %c32_182 = arith.constant 32 : index
    %253 = vector.load %arg14[%c0_181, %c32_182] : memref<4x290xf32, #tpu.memory_space<vmem>>, vector<4x256xf32>
    %c0_183 = arith.constant 0 : index
    %c0_184 = arith.constant 0 : index
    %254 = vector.load %arg4[%c0_183, %c0_184] : memref<2x256xf32, #tpu.memory_space<vmem>>, vector<1x256xf32>
    %255 = vector.broadcast %254 : vector<1x256xf32> to vector<4x256xf32>
    %256 = arith.mulf %253, %255 : vector<4x256xf32>
    %257 = arith.truncf %256 : vector<4x256xf32> to vector<4x256xbf16>
    %c24_185 = arith.constant 24 : index
    %c0_186 = arith.constant 0 : index
    %258 = vector.load %arg15[%c24_185, %c0_186] : memref<36x256xbf16, #tpu.memory_space<vmem>>, vector<4x256xbf16>
    tpu.vector_store %arg15[%c24_185, %c0_186], %257 {strides = array<i32>} : memref<36x256xbf16, #tpu.memory_space<vmem>>, vector<4x256xbf16>,
    %c0_187 = arith.constant 0 : index
    %c33_188 = arith.constant 33 : index
    %259 = vector.load %arg14[%c0_187, %c33_188] : memref<4x290xf32, #tpu.memory_space<vmem>>, vector<4x256xf32>
    %260 = arith.truncf %259 : vector<4x256xf32> to vector<4x256xbf16>
    %c28 = arith.constant 28 : index
    %c0_189 = arith.constant 0 : index
    %261 = vector.load %arg15[%c28, %c0_189] : memref<36x256xbf16, #tpu.memory_space<vmem>>, vector<4x256xbf16>
    tpu.vector_store %arg15[%c28, %c0_189], %260 {strides = array<i32>} : memref<36x256xbf16, #tpu.memory_space<vmem>>, vector<4x256xbf16>,
    %c0_190 = arith.constant 0 : index
    %c34_191 = arith.constant 34 : index
    %262 = vector.load %arg14[%c0_190, %c34_191] : memref<4x290xf32, #tpu.memory_space<vmem>>, vector<4x256xf32>
    %c1_192 = arith.constant 1 : index
    %c0_193 = arith.constant 0 : index
    %263 = vector.load %arg4[%c1_192, %c0_193] : memref<2x256xf32, #tpu.memory_space<vmem>>, vector<1x256xf32>
    %264 = vector.broadcast %263 : vector<1x256xf32> to vector<4x256xf32>
    %265 = arith.mulf %262, %264 : vector<4x256xf32>
    %266 = arith.truncf %265 : vector<4x256xf32> to vector<4x256xbf16>
    %c32_194 = arith.constant 32 : index
    %c0_195 = arith.constant 0 : index
    %267 = vector.load %arg15[%c32_194, %c0_195] : memref<36x256xbf16, #tpu.memory_space<vmem>>, vector<4x256xbf16>
    tpu.vector_store %arg15[%c32_194, %c0_195], %266 {strides = array<i32>} : memref<36x256xbf16, #tpu.memory_space<vmem>>, vector<4x256xbf16>,
    %c0_196 = arith.constant 0 : index
    %c0_197 = arith.constant 0 : index
    %268 = vector.load %arg9[%c0_196, %c0_197] : memref<4x36xbf16, #tpu.memory_space<vmem>>, vector<4x36xbf16>
    %c0_198 = arith.constant 0 : index
    %c0_199 = arith.constant 0 : index
    %269 = vector.load %arg15[%c0_198, %c0_199] : memref<36x256xbf16, #tpu.memory_space<vmem>>, vector<36x256xbf16>
    %cst_200 = arith.constant dense<0.000000e+00> : vector<4x256xf32>
    %270 = tpu.matmul %268, %269, %cst_200 {dimension_numbers = #tpu.dot_dimension_numbers<[1], [0], [0], [1], [0, 0, 1, 1], [], []>} : vector<4x36xbf16>, vector<36x256xbf16>, vector<4x256xf32> -> vector<4x256xf32>
    %c0_201 = arith.constant 0 : index
    %c0_202 = arith.constant 0 : index
    %271 = vector.load %arg10[%c0_201, %c0_202] : memref<4x1xf32, #tpu.memory_space<vmem>>, vector<4x1xf32>
    %272 = vector.broadcast %271 : vector<4x1xf32> to vector<4x256xf32>
    %273 = arith.addf %270, %272 : vector<4x256xf32>
    %cst_203 = arith.constant 0.000000e+00 : f32
    %274 = vector.broadcast %cst_203 : f32 to vector<4x256xf32>
    %275 = arith.maximumf %273, %274 : vector<4x256xf32>
    %c0_204 = arith.constant 0 : index
    %c0_205 = arith.constant 0 : index
    %c0_206 = arith.constant 0 : index
    %276 = vector.load %arg11[%c0_204, %c0_205, %c0_206] : memref<1x4x256xf32, #tpu.memory_space<vmem>>, vector<1x4x256xf32>
    %277 = vector.shape_cast %276 : vector<1x4x256xf32> to vector<4x256xf32>
    %278 = vector.shape_cast %275 : vector<4x256xf32> to vector<1x4x256xf32>
    tpu.vector_store %arg11[%c0_204, %c0_205, %c0_206], %278 {strides = array<i32>} : memref<1x4x256xf32, #tpu.memory_space<vmem>>, vector<1x4x256xf32>,
    return
  }
  func.func @transform_0(%arg0: i32) -> (i32, i32, i32) {
    %c0_i32 = arith.constant 0 : i32
    %c0_i32_0 = arith.constant 0 : i32
    %c0_i32_1 = arith.constant 0 : i32
    return %arg0, %c0_i32, %c0_i32_0 : i32, i32, i32
  }
  func.func @transform_1(%arg0: i32) -> (i32, i32, i32) {
    %c0_i32 = arith.constant 0 : i32
    %c0_i32_0 = arith.constant 0 : i32
    %c0_i32_1 = arith.constant 0 : i32
    return %arg0, %c0_i32, %c0_i32_0 : i32, i32, i32
  }
  func.func @transform_2(%arg0: i32) -> (i32, i32) {
    %c0_i32 = arith.constant 0 : i32
    %c0_i32_0 = arith.constant 0 : i32
    %c0_i32_1 = arith.constant 0 : i32
    return %c0_i32, %c0_i32_0 : i32, i32
  }
  func.func @transform_3(%arg0: i32) -> (i32, i32) {
    %c0_i32 = arith.constant 0 : i32
    %c0_i32_0 = arith.constant 0 : i32
    %c0_i32_1 = arith.constant 0 : i32
    return %c0_i32, %c0_i32_0 : i32, i32
  }
  func.func @transform_4(%arg0: i32) -> (i32, i32) {
    %c0_i32 = arith.constant 0 : i32
    %c0_i32_0 = arith.constant 0 : i32
    %c0_i32_1 = arith.constant 0 : i32
    return %c0_i32, %c0_i32_0 : i32, i32
  }
  func.func @transform_5(%arg0: i32) -> (i32, i32) {
    %c0_i32 = arith.constant 0 : i32
    %c0_i32_0 = arith.constant 0 : i32
    %c0_i32_1 = arith.constant 0 : i32
    return %c0_i32, %c0_i32_0 : i32, i32
  }
  func.func @transform_6(%arg0: i32) -> (i32, i32) {
    %c0_i32 = arith.constant 0 : i32
    %c0_i32_0 = arith.constant 0 : i32
    %c0_i32_1 = arith.constant 0 : i32
    return %c0_i32, %c0_i32_0 : i32, i32
  }
  func.func @transform_7(%arg0: i32) -> (i32, i32) {
    %c0_i32 = arith.constant 0 : i32
    %c0_i32_0 = arith.constant 0 : i32
    %c0_i32_1 = arith.constant 0 : i32
    return %c0_i32, %c0_i32_0 : i32, i32
  }
  func.func @transform_8(%arg0: i32) -> (i32, i32) {
    %c0_i32 = arith.constant 0 : i32
    %c0_i32_0 = arith.constant 0 : i32
    %c0_i32_1 = arith.constant 0 : i32
    return %c0_i32, %c0_i32_0 : i32, i32
  }
  func.func @transform_9(%arg0: i32) -> (i32, i32) {
    %c0_i32 = arith.constant 0 : i32
    %c0_i32_0 = arith.constant 0 : i32
    %c0_i32_1 = arith.constant 0 : i32
    return %c0_i32, %c0_i32_0 : i32, i32
  }
  func.func @transform_10(%arg0: i32) -> (i32, i32, i32) {
    %c0_i32 = arith.constant 0 : i32
    %c0_i32_0 = arith.constant 0 : i32
    %c0_i32_1 = arith.constant 0 : i32
    return %arg0, %c0_i32, %c0_i32_0 : i32, i32, i32
  }
}

</mosaic_0001>

<llo_original>
// kernel: tpu_custom_call.1
$region0: #{tpu_custom_call.1}
  #allocation0 [shape = 'u32[]', space=smem, size = 0x4, offset = 0x4, fixed_abs, tag = 'smem constant byte address 0x4 - core index']
  #allocation1 [shape = 'u32[72,128]{1,0:T(1,128)}', space=vmem, size = 0x9000, scoped, tag = 'internal scratch']
  #allocation2 [shape = 'f32[8,290]{1,0:T(8,128)}', space=vmem, size = 0x3000, scoped, tag = 'scratch operand']
  #allocation3 [shape = 'bf16[72,256]{1,0:T(8,128)(2,1)}', space=vmem, size = 0x9000, scoped, tag = 'scratch operand']
  #allocation4 [shape = 'f32[4,290]{1,0:T(4,128)}', space=vmem, size = 0x1800, scoped, tag = 'scratch operand']
  #allocation5 [shape = 'bf16[36,256]{1,0:T(8,128)(2,1)}', space=vmem, size = 0x5000, scoped, tag = 'scratch operand']
  %s0 = inlined_call_operand.hbm [shape: f32[2,4,256], index: 0, kind: input, shape index: {}]
  %s1 = inlined_call_operand.hbm [shape: f32[2,8,64], index: 1, kind: input, shape index: {}]
  %s2 = inlined_call_operand.vmem [shape: bf16[8,16], index: 2, kind: input, shape index: {}]
  %s3 = inlined_call_operand.vmem [shape: f32[2,256], index: 3, kind: input, shape index: {}]
  %s4 = inlined_call_operand.vmem [shape: bf16[4,8], index: 4, kind: input, shape index: {}]
  %s5 = inlined_call_operand.vmem [shape: f32[4,1], index: 5, kind: input, shape index: {}]
  %s6 = inlined_call_operand.vmem [shape: bf16[4,72], index: 6, kind: input, shape index: {}]
  %s7 = inlined_call_operand.vmem [shape: f32[4,1], index: 7, kind: input, shape index: {}]
  %s8 = inlined_call_operand.vmem [shape: bf16[4,36], index: 8, kind: input, shape index: {}]
  %s9 = inlined_call_operand.vmem [shape: f32[4,1], index: 9, kind: input, shape index: {}]
  %s10 = inlined_call_operand.hbm [shape: f32[2,4,256], index: 10, kind: output, shape index: {}]
  %s11 = sld [smem:[#allocation0]]
  $region81: #{tpu_custom_call.1} parent=0
    _
  %s13 = ssub.s32 1, %s11
  %s14 = scalar_select 0, %s13, %s11
  $region1: #{tpu_custom_call.1} parent=0
    #allocation6 [shape = 'u8[8192]{0}', space=vmem, size = 0x2000, scoped, tag = 'input window, operand 0']
    #allocation7 [shape = 's32[2]{0}', space=sflag, size = 0x8, scoped, tag = 'scoped memory for tpu_custom_call.1']
    #allocation8 [shape = 's32[2]{0}', space=sflag, size = 0x8, scoped, tag = 'scoped memory for tpu_custom_call.1']
    #allocation9 [shape = 'u8[8192]{0}', space=vmem, size = 0x2000, scoped, tag = 'input window, operand 1']
    #allocation10 [shape = 's32[2]{0}', space=sflag, size = 0x8, scoped, tag = 'scoped memory for tpu_custom_call.1']
    #allocation11 [shape = 'u8[8192]{0}', space=vmem, size = 0x2000, scoped, tag = 'output window, operand 0']
    %15 = vsyncpa [#allocation7], 0
    %s16 = scalar_lea.sflag [#allocation7], 1
    %17 = vsyncpa %s16, 0
    %18 = vsyncpa [#allocation10], 0
    %s19 = scalar_lea.sflag [#allocation10], 1
    %20 = vsyncpa %s19, 0
    %21 = vsyncpa [#allocation8], 0
    %s22 = scalar_lea.sflag [#allocation8], 1
    %23 = vsyncpa %s22, 0
    loop: start=0, step=1, limit=4
    $region2: #{tpu_custom_call.1} parent=1 // loop_pre_header
      _
    $region3: #{tpu_custom_call.1} parent=1 // loop_header
      %s25 = sphi 0, %s29
      %p26 = scmp.ge.s32.totalorder %s25, 4
      %s35 = sphi 0, %s37
      %s38 = sphi 0, %s35
      %s39 = sphi 0, %s38
      %s55 = sphi 0, %s39
      %s61 = sphi 0, %s63
      %s64 = sphi 0, %s61
      %s65 = sphi 0, %s64
      %s81 = sphi 0, %s65
      %s85 = sphi 0, %s85
      %s87 = sphi 0, %s85
      %s88 = sphi 0, %s87
      %s102 = sphi 0, %s88
      %s106 = sphi 0, %s106
      %s108 = sphi 0, %s106
      %s109 = sphi 0, %s108
      %s123 = sphi 0, %s109
      %s127 = sphi 0, %s127
      %s129 = sphi 0, %s127
      %s130 = sphi 0, %s129
      %s144 = sphi 0, %s130
      %s148 = sphi 0, %s148
      %s150 = sphi 0, %s148
      %s151 = sphi 0, %s150
      %s165 = sphi 0, %s151
      %s169 = sphi 0, %s169
      %s171 = sphi 0, %s169
      %s172 = sphi 0, %s171
      %s186 = sphi 0, %s172
      %s190 = sphi 0, %s190
      %s192 = sphi 0, %s190
      %s193 = sphi 0, %s192
      %s207 = sphi 0, %s193
      %s211 = sphi 0, %s211
      %s213 = sphi 0, %s211
      %s214 = sphi 0, %s213
      %s228 = sphi 0, %s214
      %s232 = sphi 0, %s232
      %s234 = sphi 0, %s232
      %s235 = sphi 0, %s234
      %s249 = sphi 0, %s235
      %s255 = sphi 0, %s257
      %s258 = sphi 0, %s255
      %s259 = sphi 0, %s258
      %s275 = sphi 0, %s259
    $region4: #{tpu_custom_call.1} parent=1 // loop_header_branch
      %28 = sbr.rel (%p26) target = $region8
    $region5: #{tpu_custom_call.1} parent=1 // loop_body
      %s30 = ssub.s32 %s25, 1
      %s31 = ssub.s32 %s25, 2
      %s32 = sadd.s32 %s25, 1
      %s33 = ssub.s32 %s25, %s32
      %p34 = scmp.eq.s32.totalorder %s33, 0
      %s36 = sadd.s32 %s35, 1
      %s37 = scalar_select %p34, %s35, %s36
      %p40 = pneg %p34
      %p41 = scmp.eq.s32.totalorder %s25, 1
      %p42 = por %p40, %p41
      %p43 = scmp.ne.s32.totalorder %s35, %s38
      %p44 = scmp.eq.s32.totalorder %s25, 0
      %p45 = por %p43, %p44
      %p46 = scmp.ne.s32.totalorder %s35, %s38
      %p47 = scmp.eq.s32.totalorder %s30, 1
      %p48 = por %p46, %p47
      %p49 = scmp.ne.s32.totalorder %s38, %s39
      %p50 = scmp.eq.s32.totalorder %s30, 0
      %p51 = por %p49, %p50
      %p52 = scmp.ne.s32.totalorder %s38, %s39
      %p53 = scmp.eq.s32.totalorder %s31, 1
      %p54 = por %p52, %p53
      %p56 = scmp.ne.s32.totalorder %s39, %s55
      %p57 = scmp.eq.s32.totalorder %s31, 0
      %p58 = por %p56, %p57
      %s59 = ssub.s32 %s25, %s32
      %p60 = scmp.eq.s32.totalorder %s59, 0
      %s62 = sadd.s32 %s61, 1
      %s63 = scalar_select %p60, %s61, %s62
      %p66 = pneg %p60
      %p67 = scmp.eq.s32.totalorder %s25, 1
      %p68 = por %p66, %p67
      %p69 = scmp.ne.s32.totalorder %s61, %s64
      %p70 = scmp.eq.s32.totalorder %s25, 0
      %p71 = por %p69, %p70
      %p72 = scmp.ne.s32.totalorder %s61, %s64
      %p73 = scmp.eq.s32.totalorder %s30, 1
      %p74 = por %p72, %p73
      %p75 = scmp.ne.s32.totalorder %s64, %s65
      %p76 = scmp.eq.s32.totalorder %s30, 0
      %p77 = por %p75, %p76
      %p78 = scmp.ne.s32.totalorder %s64, %s65
      %p79 = scmp.eq.s32.totalorder %s31, 1
      %p80 = por %p78, %p79
      %p82 = scmp.ne.s32.totalorder %s65, %s81
      %p83 = scmp.eq.s32.totalorder %s31, 0
      %p84 = por %p82, %p83
      %s86 = sadd.s32 %s85, 1
      %p89 = scmp.eq.s32.totalorder %s25, 1
      %p90 = scmp.ne.s32.totalorder %s85, %s87
      %p91 = scmp.eq.s32.totalorder %s25, 0
      %p92 = por %p90, %p91
      %p93 = scmp.ne.s32.totalorder %s85, %s87
      %p94 = scmp.eq.s32.totalorder %s30, 1
      %p95 = por %p93, %p94
      %p96 = scmp.ne.s32.totalorder %s87, %s88
      %p97 = scmp.eq.s32.totalorder %s30, 0
      %p98 = por %p96, %p97
      %p99 = scmp.ne.s32.totalorder %s87, %s88
      %p100 = scmp.eq.s32.totalorder %s31, 1
      %p101 = por %p99, %p100
      %p103 = scmp.ne.s32.totalorder %s88, %s102
      %p104 = scmp.eq.s32.totalorder %s31, 0
      %p105 = por %p103, %p104
      %s107 = sadd.s32 %s106, 1
      %p110 = scmp.eq.s32.totalorder %s25, 1
      %p111 = scmp.ne.s32.totalorder %s106, %s108
      %p112 = scmp.eq.s32.totalorder %s25, 0
      %p113 = por %p111, %p112
      %p114 = scmp.ne.s32.totalorder %s106, %s108
      %p115 = scmp.eq.s32.totalorder %s30, 1
      %p116 = por %p114, %p115
      %p117 = scmp.ne.s32.totalorder %s108, %s109
      %p118 = scmp.eq.s32.totalorder %s30, 0
      %p119 = por %p117, %p118
      %p120 = scmp.ne.s32.totalorder %s108, %s109
      %p121 = scmp.eq.s32.totalorder %s31, 1
      %p122 = por %p120, %p121
      %p124 = scmp.ne.s32.totalorder %s109, %s123
      %p125 = scmp.eq.s32.totalorder %s31, 0
      %p126 = por %p124, %p125
      %s128 = sadd.s32 %s127, 1
      %p131 = scmp.eq.s32.totalorder %s25, 1
      %p132 = scmp.ne.s32.totalorder %s127, %s129
      %p133 = scmp.eq.s32.totalorder %s25, 0
      %p134 = por %p132, %p133
      %p135 = scmp.ne.s32.totalorder %s127, %s129
      %p136 = scmp.eq.s32.totalorder %s30, 1
      %p137 = por %p135, %p136
      %p138 = scmp.ne.s32.totalorder %s129, %s130
      %p139 = scmp.eq.s32.totalorder %s30, 0
      %p140 = por %p138, %p139
      %p141 = scmp.ne.s32.totalorder %s129, %s130
      %p142 = scmp.eq.s32.totalorder %s31, 1
      %p143 = por %p141, %p142
      %p145 = scmp.ne.s32.totalorder %s130, %s144
      %p146 = scmp.eq.s32.totalorder %s31, 0
      %p147 = por %p145, %p146
      %s149 = sadd.s32 %s148, 1
      %p152 = scmp.eq.s32.totalorder %s25, 1
      %p153 = scmp.ne.s32.totalorder %s148, %s150
      %p154 = scmp.eq.s32.totalorder %s25, 0
      %p155 = por %p153, %p154
      %p156 = scmp.ne.s32.totalorder %s148, %s150
      %p157 = scmp.eq.s32.totalorder %s30, 1
      %p158 = por %p156, %p157
      %p159 = scmp.ne.s32.totalorder %s150, %s151
      %p160 = scmp.eq.s32.totalorder %s30, 0
      %p161 = por %p159, %p160
      %p162 = scmp.ne.s32.totalorder %s150, %s151
      %p163 = scmp.eq.s32.totalorder %s31, 1
      %p164 = por %p162, %p163
      %p166 = scmp.ne.s32.totalorder %s151, %s165
      %p167 = scmp.eq.s32.totalorder %s31, 0
      %p168 = por %p166, %p167
      %s170 = sadd.s32 %s169, 1
      %p173 = scmp.eq.s32.totalorder %s25, 1
      %p174 = scmp.ne.s32.totalorder %s169, %s171
      %p175 = scmp.eq.s32.totalorder %s25, 0
      %p176 = por %p174, %p175
      %p177 = scmp.ne.s32.totalorder %s169, %s171
      %p178 = scmp.eq.s32.totalorder %s30, 1
      %p179 = por %p177, %p178
      %p180 = scmp.ne.s32.totalorder %s171, %s172
      %p181 = scmp.eq.s32.totalorder %s30, 0
      %p182 = por %p180, %p181
      %p183 = scmp.ne.s32.totalorder %s171, %s172
      %p184 = scmp.eq.s32.totalorder %s31, 1
      %p185 = por %p183, %p184
      %p187 = scmp.ne.s32.totalorder %s172, %s186
      %p188 = scmp.eq.s32.totalorder %s31, 0
      %p189 = por %p187, %p188
      %s191 = sadd.s32 %s190, 1
      %p194 = scmp.eq.s32.totalorder %s25, 1
      %p195 = scmp.ne.s32.totalorder %s190, %s192
      %p196 = scmp.eq.s32.totalorder %s25, 0
      %p197 = por %p195, %p196
      %p198 = scmp.ne.s32.totalorder %s190, %s192
      %p199 = scmp.eq.s32.totalorder %s30, 1
      %p200 = por %p198, %p199
      %p201 = scmp.ne.s32.totalorder %s192, %s193
      %p202 = scmp.eq.s32.totalorder %s30, 0
      %p203 = por %p201, %p202
      %p204 = scmp.ne.s32.totalorder %s192, %s193
      %p205 = scmp.eq.s32.totalorder %s31, 1
      %p206 = por %p204, %p205
      %p208 = scmp.ne.s32.totalorder %s193, %s207
      %p209 = scmp.eq.s32.totalorder %s31, 0
      %p210 = por %p208, %p209
      %s212 = sadd.s32 %s211, 1
      %p215 = scmp.eq.s32.totalorder %s25, 1
      %p216 = scmp.ne.s32.totalorder %s211, %s213
      %p217 = scmp.eq.s32.totalorder %s25, 0
      %p218 = por %p216, %p217
      %p219 = scmp.ne.s32.totalorder %s211, %s213
      %p220 = scmp.eq.s32.totalorder %s30, 1
      %p221 = por %p219, %p220
      %p222 = scmp.ne.s32.totalorder %s213, %s214
      %p223 = scmp.eq.s32.totalorder %s30, 0
      %p224 = por %p222, %p223
      %p225 = scmp.ne.s32.totalorder %s213, %s214
      %p226 = scmp.eq.s32.totalorder %s31, 1
      %p227 = por %p225, %p226
      %p229 = scmp.ne.s32.totalorder %s214, %s228
      %p230 = scmp.eq.s32.totalorder %s31, 0
      %p231 = por %p229, %p230
      %s233 = sadd.s32 %s232, 1
      %p236 = scmp.eq.s32.totalorder %s25, 1
      %p237 = scmp.ne.s32.totalorder %s232, %s234
      %p238 = scmp.eq.s32.totalorder %s25, 0
      %p239 = por %p237, %p238
      %p240 = scmp.ne.s32.totalorder %s232, %s234
      %p241 = scmp.eq.s32.totalorder %s30, 1
      %p242 = por %p240, %p241
      %p243 = scmp.ne.s32.totalorder %s234, %s235
      %p244 = scmp.eq.s32.totalorder %s30, 0
      %p245 = por %p243, %p244
      %p246 = scmp.ne.s32.totalorder %s234, %s235
      %p247 = scmp.eq.s32.totalorder %s31, 1
      %p248 = por %p246, %p247
      %p250 = scmp.ne.s32.totalorder %s235, %s249
      %p251 = scmp.eq.s32.totalorder %s31, 0
      %p252 = por %p250, %p251
      %s253 = ssub.s32 %s25, %s32
      %p254 = scmp.eq.s32.totalorder %s253, 0
      %s256 = sadd.s32 %s255, 1
      %s257 = scalar_select %p254, %s255, %s256
      %p260 = pneg %p254
      %p261 = scmp.eq.s32.totalorder %s25, 1
      %p262 = por %p260, %p261
      %p263 = scmp.ne.s32.totalorder %s255, %s258
      %p264 = scmp.eq.s32.totalorder %s25, 0
      %p265 = por %p263, %p264
      %p266 = scmp.ne.s32.totalorder %s255, %s258
      %p267 = scmp.eq.s32.totalorder %s30, 1
      %p268 = por %p266, %p267
      %p269 = scmp.ne.s32.totalorder %s258, %s259
      %p270 = scmp.eq.s32.totalorder %s30, 0
      %p271 = por %p269, %p270
      %p272 = scmp.ne.s32.totalorder %s258, %s259
      %p273 = scmp.eq.s32.totalorder %s31, 1
      %p274 = por %p272, %p273
      %p276 = scmp.ne.s32.totalorder %s259, %s275
      %p277 = scmp.eq.s32.totalorder %s31, 0
      %p278 = por %p276, %p277
      %p279 = scmp.le.s32.totalorder 1, %s25
      %p280 = scmp.lt.s32.totalorder %s25, 3
      %p281 = pnand %p279, %p280
      %p282 = pneg %p281
      // Predicated region
      $region9: #{tpu_custom_call.1} parent=5 // pred_check
        _
      $region10: #{tpu_custom_call.1} parent=5 // pred_check_branch
        %284 = sbr.rel (%p281) target = $region12
      $region11: #{tpu_custom_call.1} parent=5 // pred_region
        %s285 = ssub.s32 %s25, 1
        // Predicated region
        $region13: #{tpu_custom_call.1} parent=11 // pred_check
          %p286 = pneg %p98
        $region14: #{tpu_custom_call.1} parent=11 // pred_check_branch
          %288 = sbr.rel (%p286) target = $region16
        $region15: #{tpu_custom_call.1} parent=11 // pred_region
          _
        $region16: #{tpu_custom_call.1} parent=11 // pred_fallthru
          _
        // Predicated region
        $region17: #{tpu_custom_call.1} parent=11 // pred_check
          %p289 = pneg %p119
        $region18: #{tpu_custom_call.1} parent=11 // pred_check_branch
          %291 = sbr.rel (%p289) target = $region20
        $region19: #{tpu_custom_call.1} parent=11 // pred_region
          _
        $region20: #{tpu_custom_call.1} parent=11 // pred_fallthru
          _
        // Predicated region
        $region21: #{tpu_custom_call.1} parent=11 // pred_check
          %p292 = pneg %p140
        $region22: #{tpu_custom_call.1} parent=11 // pred_check_branch
          %294 = sbr.rel (%p292) target = $region24
        $region23: #{tpu_custom_call.1} parent=11 // pred_region
          _
        $region24: #{tpu_custom_call.1} parent=11 // pred_fallthru
          _
        // Predicated region
        $region25: #{tpu_custom_call.1} parent=11 // pred_check
          %p295 = pneg %p161
        $region26: #{tpu_custom_call.1} parent=11 // pred_check_branch
          %297 = sbr.rel (%p295) target = $region28
        $region27: #{tpu_custom_call.1} parent=11 // pred_region
          _
        $region28: #{tpu_custom_call.1} parent=11 // pred_fallthru
          _
        // Predicated region
        $region29: #{tpu_custom_call.1} parent=11 // pred_check
          %p298 = pneg %p182
        $region30: #{tpu_custom_call.1} parent=11 // pred_check_branch
          %300 = sbr.rel (%p298) target = $region32
        $region31: #{tpu_custom_call.1} parent=11 // pred_region
          _
        $region32: #{tpu_custom_call.1} parent=11 // pred_fallthru
          _
        // Predicated region
        $region33: #{tpu_custom_call.1} parent=11 // pred_check
          %p301 = pneg %p203
        $region34: #{tpu_custom_call.1} parent=11 // pred_check_branch
          %303 = sbr.rel (%p301) target = $region36
        $region35: #{tpu_custom_call.1} parent=11 // pred_region
          _
        $region36: #{tpu_custom_call.1} parent=11 // pred_fallthru
          _
        // Predicated region
        $region37: #{tpu_custom_call.1} parent=11 // pred_check
          %p304 = pneg %p224
        $region38: #{tpu_custom_call.1} parent=11 // pred_check_branch
          %306 = sbr.rel (%p304) target = $region40
        $region39: #{tpu_custom_call.1} parent=11 // pred_region
          _
        $region40: #{tpu_custom_call.1} parent=11 // pred_fallthru
          _
        // Predicated region
        $region41: #{tpu_custom_call.1} parent=11 // pred_check
          %p307 = pneg %p245
        $region42: #{tpu_custom_call.1} parent=11 // pred_check_branch
          %309 = sbr.rel (%p307) target = $region44
        $region43: #{tpu_custom_call.1} parent=11 // pred_region
          _
        $region44: #{tpu_custom_call.1} parent=11 // pred_fallthru
          _
      $region12: #{tpu_custom_call.1} parent=5 // pred_fallthru
        _
      %p310 = scmp.lt.s32.totalorder %s25, 2
      // Predicated region
      $region45: #{tpu_custom_call.1} parent=5 // pred_check
        %p311 = pneg %p310
      $region46: #{tpu_custom_call.1} parent=5 // pred_check_branch
        %313 = sbr.rel (%p311) target = $region48
      $region47: #{tpu_custom_call.1} parent=5 // pred_region
        // Predicated region
        $region49: #{tpu_custom_call.1} parent=47 // pred_check
          %p314 = pneg %p45
        $region50: #{tpu_custom_call.1} parent=47 // pred_check_branch
          %316 = sbr.rel (%p314) target = $region52
        $region51: #{tpu_custom_call.1} parent=47 // pred_region
          %s317 = sand.u32 %s35, 1
          %s318 = scalar_lea.sflag [#allocation7], %s317
          %s319 = sand.u32 %s35, 1
          %s320 = smul.addr %s319, 8
          %s321 = scalar_lea.vmem [#allocation6], %s320
          %323 = vsyncadd %s318, 0
          %s324 = smul.addr %s25, 2
          %s325 = smul.addr %s324, 4
          %s326 = scalar_lea.hbm %s0, %s325
          %s328 = sshll.u32 %s326, 4
          %s329 = int_to_ptr.hbm [resolvable:$true] %s328
          %s330 = sshll.u32 %s321, 4
          %s331 = int_to_ptr.vmem [resolvable:$true] %s330
          %333 = dma.hbm_to_vmem [thread:$0]  %s329, 128, %s331, %s318
        $region52: #{tpu_custom_call.1} parent=47 // pred_fallthru
          _
        // Predicated region
        $region53: #{tpu_custom_call.1} parent=47 // pred_check
          %p334 = pneg %p71
        $region54: #{tpu_custom_call.1} parent=47 // pred_check_branch
          %336 = sbr.rel (%p334) target = $region56
        $region55: #{tpu_custom_call.1} parent=47 // pred_region
          %s337 = sand.u32 %s61, 1
          %s338 = scalar_lea.sflag [#allocation10], %s337
          %s339 = sand.u32 %s61, 1
          %s340 = smul.addr %s339, 8
          %s341 = scalar_lea.vmem [#allocation9], %s340
          %343 = vsyncadd %s338, 0
          %s344 = smul.addr %s25, 8
          %s345 = scalar_lea.hbm %s1, %s344
          %s347 = sshll.u32 %s345, 4
          %s348 = int_to_ptr.hbm [resolvable:$true] %s347
          %s349 = sshll.u32 %s341, 4
          %s350 = int_to_ptr.vmem [resolvable:$true] %s349
          %352 = dma.hbm_to_vmem [thread:$0]  %s348, 128, %s350, %s338
        $region56: #{tpu_custom_call.1} parent=47 // pred_fallthru
          _
      $region48: #{tpu_custom_call.1} parent=5 // pred_fallthru
        _
      %p353 = scmp.le.s32.totalorder 1, %s25
      %p354 = scmp.lt.s32.totalorder %s25, 3
      %p355 = pnand %p353, %p354
      %p356 = pneg %p355
      // Predicated region
      $region57: #{tpu_custom_call.1} parent=5 // pred_check
        _
      $region58: #{tpu_custom_call.1} parent=5 // pred_check_branch
        %358 = sbr.rel (%p355) target = $region60
      $region59: #{tpu_custom_call.1} parent=5 // pred_region
        %s359 = ssub.s32 %s25, 1
        %s360 = sand.u32 %s38, 1
        %s361 = scalar_lea.sflag [#allocation7], %s360
        %s362 = sand.u32 %s38, 1
        %s363 = smul.addr %s362, 8
        %s364 = scalar_lea.vmem [#allocation6], %s363
        // Predicated region
        $region61: #{tpu_custom_call.1} parent=59 // pred_check
          %p365 = pneg %p51
        $region62: #{tpu_custom_call.1} parent=59 // pred_check_branch
          %367 = sbr.rel (%p365) target = $region64
        $region63: #{tpu_custom_call.1} parent=59 // pred_region
          %369 = dma.done %s361, 128
        $region64: #{tpu_custom_call.1} parent=59 // pred_fallthru
          _
        %s370 = sand.u32 %s64, 1
        %s371 = scalar_lea.sflag [#allocation10], %s370
        %s372 = sand.u32 %s64, 1
        %s373 = smul.addr %s372, 8
        %s374 = scalar_lea.vmem [#allocation9], %s373
        // Predicated region
        $region65: #{tpu_custom_call.1} parent=59 // pred_check
          %p375 = pneg %p77
        $region66: #{tpu_custom_call.1} parent=59 // pred_check_branch
          %377 = sbr.rel (%p375) target = $region68
        $region67: #{tpu_custom_call.1} parent=59 // pred_region
          %379 = dma.done %s371, 128
        $region68: #{tpu_custom_call.1} parent=59 // pred_fallthru
          _
        %s380 = sand.u32 %s38, 1
        %s381 = scalar_lea.sflag [#allocation7], %s380
        %s382 = sand.u32 %s38, 1
        %s383 = smul.addr %s382, 8
        %s384 = scalar_lea.vmem [#allocation6], %s383
        %p385 = pneg %p51
        %p386 = pneg %p48
        %s387 = sand.u32 %s64, 1
        %s388 = scalar_lea.sflag [#allocation10], %s387
        %s389 = sand.u32 %s64, 1
        %s390 = smul.addr %s389, 8
        %s391 = scalar_lea.vmem [#allocation9], %s390
        %p392 = pneg %p77
        %p393 = pneg %p74
        %p394 = pneg %p98
        %p395 = pneg %p95
        %p396 = pneg %p119
        %p397 = pneg %p116
        %p398 = pneg %p140
        %p399 = pneg %p137
        %p400 = pneg %p161
        %p401 = pneg %p158
        %p402 = pneg %p182
        %p403 = pneg %p179
        %p404 = pneg %p203
        %p405 = pneg %p200
        %p406 = pneg %p224
        %p407 = pneg %p221
        %p408 = pneg %p245
        %p409 = pneg %p242
        %p410 = pneg %p271
        %p411 = pneg %p268
        %s412 = sand.u32 %s258, 1
        %s413 = scalar_lea.sflag [#allocation8], %s412
        %s414 = sand.u32 %s258, 1
        %s415 = smul.addr %s414, 8
        %s416 = scalar_lea.vmem [#allocation11], %s415
        %vm418 = vcmask 138240
        %419 = vst.msk [vmem:[#allocation2] sm:$0xff] %vm418, 0.0
        %vm420 = vcmask 277640
        %421 = vst.msk [vmem:[#allocation2 + $0x10] sm:$0xff] %vm420, 0.0
        %vm422 = vcmask 134144
        %423 = vst.msk [vmem:[#allocation4] sm:$0xf] %vm422, 0.0
        %vm424 = vcmask 273544
        %425 = vst.msk [vmem:[#allocation4 + $0x8] sm:$0xf] %vm424, 0.0
        %v426 = vld [vmem:[%s4] sm:$0x3]
        %v427 = vld [vmem:[%s374] sm:$0xff]
        %v428 = vpack.c.bf16 %v427, %v427
        %v429 = vld [vmem:[%s5] sm:$0xf]
        %431 = vset.pattern.permute.xlu0 0
        %432 = vperm.xlu0 %431, %v429
        %v433 = vpop.permute.xlu0 %432
        %vm435 = vcmask 64512
        %v437 = vsel %vm435, %v426, 0
        %vm439 = vcmask 1043456
        %v441 = vsel %vm439, %v428, 0
        %443 = vmatpush.bf16.msra.mxu0 0
        %444 = vmatpush.bf16.msra.mxu0 0
        %445 = vmatpush.bf16.msra.mxu0 0
        %446 = vmatpush.bf16.msra.mxu0 0
        %447 = vmatpush.bf16.msra.mxu0 0
        %448 = vmatpush.bf16.msra.mxu0 0
        %449 = vmatpush.bf16.msra.mxu0 0
        %450 = vmatpush.bf16.msra.mxu0 %v441
        %451 = vmatmul.bf16.gmra.mxu0 %v437
        %v452 = vpop.f32.mrf.mxu0
        %v453 = vadd.f32 %v433, %v452
        %v454 = vpop.f32.mrf.mxu0
        %455 = vdwg.mxu0
        %v456 = vpack.c.bf16 %v453, %v453
        %v457 = vld [vmem:[%s2] sm:$0xf]
        %v459 = vsel %vm435, %v456, 0
        %v462 = vsel %vm439, %v457, 0
        %464 = vmatpush.bf16.msra.mxu0 0
        %465 = vmatpush.bf16.msra.mxu0 0
        %466 = vmatpush.bf16.msra.mxu0 0
        %467 = vmatpush.bf16.msra.mxu0 0
        %468 = vmatpush.bf16.msra.mxu0 0
        %469 = vmatpush.bf16.msra.mxu0 0
        %470 = vmatpush.bf16.msra.mxu0 0
        %471 = vmatpush.bf16.msra.mxu0 %v462
        %472 = vmatmul.bf16.gmra.mxu0 %v459
        %v473 = vpop.f32.mrf.mxu0
        %v474 = vadd.f32 0.0, %v473
        %v475 = vpop.f32.mrf.mxu0
        %476 = vdwg.mxu0
        %478 = vrot.lane.b32.xlu0 %v456, 120
        %v479 = vpop.permute.xlu0 %478
        %v481 = vsel %vm435, %v479, 0
        %483 = vmatpush.bf16.msra.mxu0 0
        %484 = vmatpush.bf16.msra.mxu0 0
        %485 = vmatpush.bf16.msra.mxu0 0
        %486 = vmatpush.bf16.msra.mxu0 0
        %487 = vmatpush.bf16.msra.mxu0 0
        %488 = vmatpush.bf16.msra.mxu0 0
        %489 = vmatpush.bf16.msra.mxu0 0
        %490 = vmatpush.bf16.msra.mxu0 %v462
        %491 = vmatmul.bf16.gmra.mxu0 %v481
        %v492 = vpop.f32.mrf.mxu0
        %v493 = vadd.f32 0.0, %v492
        %v494 = vpop.f32.mrf.mxu0
        %495 = vdwg.mxu0
        %496 = vrot.lane.b32.xlu0 %v456, 112
        %v497 = vpop.permute.xlu0 %496
        %v499 = vsel %vm435, %v497, 0
        %501 = vmatpush.bf16.msra.mxu0 0
        %502 = vmatpush.bf16.msra.mxu0 0
        %503 = vmatpush.bf16.msra.mxu0 0
        %504 = vmatpush.bf16.msra.mxu0 0
        %505 = vmatpush.bf16.msra.mxu0 0
        %506 = vmatpush.bf16.msra.mxu0 0
        %507 = vmatpush.bf16.msra.mxu0 0
        %508 = vmatpush.bf16.msra.mxu0 %v462
        %509 = vmatmul.bf16.gmra.mxu0 %v499
        %v510 = vpop.f32.mrf.mxu0
        %v511 = vadd.f32 0.0, %v510
        %v512 = vpop.f32.mrf.mxu0
        %513 = vdwg.mxu0
        %514 = vrot.lane.b32.xlu0 %v456, 104
        %v515 = vpop.permute.xlu0 %514
        %v517 = vsel %vm435, %v515, 0
        %519 = vmatpush.bf16.msra.mxu0 0
        %520 = vmatpush.bf16.msra.mxu0 0
        %521 = vmatpush.bf16.msra.mxu0 0
        %522 = vmatpush.bf16.msra.mxu0 0
        %523 = vmatpush.bf16.msra.mxu0 0
        %524 = vmatpush.bf16.msra.mxu0 0
        %525 = vmatpush.bf16.msra.mxu0 0
        %526 = vmatpush.bf16.msra.mxu0 %v462
        %527 = vmatmul.bf16.gmra.mxu0 %v517
        %v528 = vpop.f32.mrf.mxu0
        %v529 = vadd.f32 0.0, %v528
        %v530 = vpop.f32.mrf.mxu0
        %531 = vdwg.mxu0
        %532 = vrot.lane.b32.xlu0 %v456, 96
        %v533 = vpop.permute.xlu0 %532
        %v535 = vsel %vm435, %v533, 0
        %537 = vmatpush.bf16.msra.mxu0 0
        %538 = vmatpush.bf16.msra.mxu0 0
        %539 = vmatpush.bf16.msra.mxu0 0
        %540 = vmatpush.bf16.msra.mxu0 0
        %541 = vmatpush.bf16.msra.mxu0 0
        %542 = vmatpush.bf16.msra.mxu0 0
        %543 = vmatpush.bf16.msra.mxu0 0
        %544 = vmatpush.bf16.msra.mxu0 %v462
        %545 = vmatmul.bf16.gmra.mxu0 %v535
        %v546 = vpop.f32.mrf.mxu0
        %v547 = vadd.f32 0.0, %v546
        %v548 = vpop.f32.mrf.mxu0
        %549 = vdwg.mxu0
        %550 = vrot.lane.b32.xlu0 %v456, 88
        %v551 = vpop.permute.xlu0 %550
        %v553 = vsel %vm435, %v551, 0
        %555 = vmatpush.bf16.msra.mxu0 0
        %556 = vmatpush.bf16.msra.mxu0 0
        %557 = vmatpush.bf16.msra.mxu0 0
        %558 = vmatpush.bf16.msra.mxu0 0
        %559 = vmatpush.bf16.msra.mxu0 0
        %560 = vmatpush.bf16.msra.mxu0 0
        %561 = vmatpush.bf16.msra.mxu0 0
        %562 = vmatpush.bf16.msra.mxu0 %v462
        %563 = vmatmul.bf16.gmra.mxu0 %v553
        %v564 = vpop.f32.mrf.mxu0
        %v565 = vadd.f32 0.0, %v564
        %v566 = vpop.f32.mrf.mxu0
        %567 = vdwg.mxu0
        %568 = vrot.lane.b32.xlu0 %v456, 80
        %v569 = vpop.permute.xlu0 %568
        %v571 = vsel %vm435, %v569, 0
        %573 = vmatpush.bf16.msra.mxu0 0
        %574 = vmatpush.bf16.msra.mxu0 0
        %575 = vmatpush.bf16.msra.mxu0 0
        %576 = vmatpush.bf16.msra.mxu0 0
        %577 = vmatpush.bf16.msra.mxu0 0
        %578 = vmatpush.bf16.msra.mxu0 0
        %579 = vmatpush.bf16.msra.mxu0 0
        %580 = vmatpush.bf16.msra.mxu0 %v462
        %581 = vmatmul.bf16.gmra.mxu0 %v571
        %v582 = vpop.f32.mrf.mxu0
        %v583 = vadd.f32 0.0, %v582
        %v584 = vpop.f32.mrf.mxu0
        %585 = vdwg.mxu0
        %586 = vrot.lane.b32.xlu0 %v456, 72
        %v587 = vpop.permute.xlu0 %586
        %v589 = vsel %vm435, %v587, 0
        %591 = vmatpush.bf16.msra.mxu0 0
        %592 = vmatpush.bf16.msra.mxu0 0
        %593 = vmatpush.bf16.msra.mxu0 0
        %594 = vmatpush.bf16.msra.mxu0 0
        %595 = vmatpush.bf16.msra.mxu0 0
        %596 = vmatpush.bf16.msra.mxu0 0
        %597 = vmatpush.bf16.msra.mxu0 0
        %598 = vmatpush.bf16.msra.mxu0 %v462
        %599 = vmatmul.bf16.gmra.mxu0 %v589
        %v600 = vpop.f32.mrf.mxu0
        %v601 = vadd.f32 0.0, %v600
        %v602 = vpop.f32.mrf.mxu0
        %603 = vdwg.mxu0
        %v604 = vld [vmem:[%s364] sm:$0xff]
        %606 = vst [vmem:[#allocation1] ss:$2 sm:$0xff] %v604
        %v607 = vld.sshfl [vmem:[#allocation1] sm:$0xff pattern:$0x75316420]
        %v608 = vld.sshfl [vmem:[#allocation1 + $0x8] sm:$0xff pattern:$0x75316420]
        %609 = vrot.lane.b32.xlu0 %v607, 17
        %v610 = vpop.permute.xlu0 %609
        %611 = vrot.lane.b32.xlu0 %v608, 17
        %v612 = vpop.permute.xlu0 %611
        %v613 = vsel %vm418, %v610, %v612
        %vm617 = vcmask 1043592
        %618 = vst.msk [vmem:[#allocation2] sm:$0xf] %vm617, %v610
        %619 = vst [vmem:[#allocation2 + $0x8] sm:$0xf] %v613
        %620 = vst.msk [vmem:[#allocation2 + $0x10] sm:$0xf] %vm422, %v612
        %v621 = vmax.f32 %v474, 0.0
        %v623 = vrot.slane %v621, 4
        %624 = vrot.lane.b32.xlu0 %v623, 17
        %v625 = vpop.permute.xlu0 %624
        %vm627 = vcmask 269452
        %628 = vst.msk [vmem:[#allocation2] sm:$0xf0] %vm627, %v625
        %v629 = vmul.f32 %v474, 0.75
        %v630 = vmul.f32 %v493, 0.25
        %v631 = vadd.f32 %v629, %v630
        %v632 = vmax.f32 %v631, 0.0
        %v634 = vrot.slane %v632, 4
        %635 = vrot.lane.b32.xlu0 %v634, 33
        %v636 = vpop.permute.xlu0 %635
        %vm638 = vcmask 400652
        %639 = vst.msk [vmem:[#allocation2] sm:$0xf0] %vm638, %v636
        %v640 = vmul.f32 %v474, 0.25
        %v641 = vmul.f32 %v493, 0.75
        %v642 = vadd.f32 %v640, %v641
        %v643 = vmax.f32 %v642, 0.0
        %v645 = vrot.slane %v643, 4
        %646 = vrot.lane.b32.xlu0 %v645, 49
        %v647 = vpop.permute.xlu0 %646
        %vm649 = vcmask 531852
        %650 = vst.msk [vmem:[#allocation2] sm:$0xf0] %vm649, %v647
        %v651 = vmul.f32 %v511, 0.25
        %v652 = vadd.f32 %v641, %v651
        %v653 = vmax.f32 %v652, 0.0
        %v655 = vrot.slane %v653, 4
        %656 = vrot.lane.b32.xlu0 %v655, 65
        %v657 = vpop.permute.xlu0 %656
        %vm659 = vcmask 663052
        %660 = vst.msk [vmem:[#allocation2] sm:$0xf0] %vm659, %v657
        %v661 = vmul.f32 %v511, 0.75
        %v662 = vadd.f32 %v630, %v661
        %v663 = vmax.f32 %v662, 0.0
        %v665 = vrot.slane %v663, 4
        %666 = vrot.lane.b32.xlu0 %v665, 81
        %v667 = vpop.permute.xlu0 %666
        %vm669 = vcmask 794252
        %670 = vst.msk [vmem:[#allocation2] sm:$0xf0] %vm669, %v667
        %v671 = vmul.f32 %v529, 0.25
        %v672 = vadd.f32 %v661, %v671
        %v673 = vmax.f32 %v672, 0.0
        %v675 = vrot.slane %v673, 4
        %676 = vrot.lane.b32.xlu0 %v675, 97
        %v677 = vpop.permute.xlu0 %676
        %vm679 = vcmask 925452
        %680 = vst.msk [vmem:[#allocation2] sm:$0xf0] %vm679, %v677
        %v681 = vmul.f32 %v529, 0.75
        %v682 = vadd.f32 %v651, %v681
        %v683 = vmax.f32 %v682, 0.0
        %v685 = vrot.slane %v683, 4
        %686 = vrot.lane.b32.xlu0 %v685, 113
        %v687 = vpop.permute.xlu0 %686
        %vm689 = vcmask 1048460
        %690 = vst.msk [vmem:[#allocation2] sm:$0xf0] %vm689, %v687
        %vm691 = vcmask 7172
        %692 = vst.msk [vmem:[#allocation2 + $0x8] sm:$0xf0] %vm691, %v687
        %v693 = vmul.f32 %v547, 0.25
        %v694 = vadd.f32 %v681, %v693
        %v695 = vmax.f32 %v694, 0.0
        %v697 = vrot.slane %v695, 4
        %698 = vrot.lane.b32.xlu0 %v697, 1
        %v699 = vpop.permute.xlu0 %698
        %vm701 = vcmask 138252
        %702 = vst.msk [vmem:[#allocation2 + $0x8] sm:$0xf0] %vm701, %v699
        %v703 = vmul.f32 %v547, 0.75
        %v704 = vadd.f32 %v671, %v703
        %v705 = vmax.f32 %v704, 0.0
        %v707 = vrot.slane %v705, 4
        %708 = vrot.lane.b32.xlu0 %v707, 17
        %v709 = vpop.permute.xlu0 %708
        %711 = vst.msk [vmem:[#allocation2 + $0x8] sm:$0xf0] %vm627, %v709
        %v712 = vmul.f32 %v565, 0.25
        %v713 = vadd.f32 %v703, %v712
        %v714 = vmax.f32 %v713, 0.0
        %v716 = vrot.slane %v714, 4
        %717 = vrot.lane.b32.xlu0 %v716, 33
        %v718 = vpop.permute.xlu0 %717
        %720 = vst.msk [vmem:[#allocation2 + $0x8] sm:$0xf0] %vm638, %v718
        %v721 = vmul.f32 %v565, 0.75
        %v722 = vadd.f32 %v693, %v721
        %v723 = vmax.f32 %v722, 0.0
        %v725 = vrot.slane %v723, 4
        %726 = vrot.lane.b32.xlu0 %v725, 49
        %v727 = vpop.permute.xlu0 %726
        %729 = vst.msk [vmem:[#allocation2 + $0x8] sm:$0xf0] %vm649, %v727
        %v730 = vmul.f32 %v583, 0.25
        %v731 = vadd.f32 %v721, %v730
        %v732 = vmax.f32 %v731, 0.0
        %v734 = vrot.slane %v732, 4
        %735 = vrot.lane.b32.xlu0 %v734, 65
        %v736 = vpop.permute.xlu0 %735
        %738 = vst.msk [vmem:[#allocation2 + $0x8] sm:$0xf0] %vm659, %v736
        %v739 = vmul.f32 %v583, 0.75
        %v740 = vadd.f32 %v712, %v739
        %v741 = vmax.f32 %v740, 0.0
        %v743 = vrot.slane %v741, 4
        %744 = vrot.lane.b32.xlu0 %v743, 81
        %v745 = vpop.permute.xlu0 %744
        %747 = vst.msk [vmem:[#allocation2 + $0x8] sm:$0xf0] %vm669, %v745
        %v748 = vmul.f32 %v601, 0.25
        %v749 = vadd.f32 %v739, %v748
        %v750 = vmax.f32 %v749, 0.0
        %v752 = vrot.slane %v750, 4
        %753 = vrot.lane.b32.xlu0 %v752, 97
        %v754 = vpop.permute.xlu0 %753
        %756 = vst.msk [vmem:[#allocation2 + $0x8] sm:$0xf0] %vm679, %v754
        %v757 = vmul.f32 %v601, 0.75
        %v758 = vadd.f32 %v730, %v757
        %v759 = vmax.f32 %v758, 0.0
        %v761 = vrot.slane %v759, 4
        %762 = vrot.lane.b32.xlu0 %v761, 113
        %v763 = vpop.permute.xlu0 %762
        %765 = vst.msk [vmem:[#allocation2 + $0x8] sm:$0xf0] %vm689, %v763
        %766 = vst.msk [vmem:[#allocation2 + $0x10] sm:$0xf0] %vm691, %v763
        %v767 = vmax.f32 %v601, 0.0
        %v769 = vrot.slane %v767, 4
        %770 = vrot.lane.b32.xlu0 %v769, 1
        %v771 = vpop.permute.xlu0 %770
        %773 = vst.msk [vmem:[#allocation2 + $0x10] sm:$0xf0] %vm701, %v771
        %v774 = vld [vmem:[#allocation2] sm:$0xff]
        %v775 = vld [vmem:[#allocation2 + $0x8] sm:$0xff]
        %v776 = vld [vmem:[%s3] ss:$2 sm:$0x3]
        %v778 = vperm.slane %v776, 0
        %v779 = vperm.slane %v776, 1
        %v782 = vmul.f32 %v774, %v778
        %v783 = vmul.f32 %v775, %v779
        %v784 = vpack.c.bf16 %v783, %v782
        %785 = vst [vmem:[#allocation3] sm:$0xff] %v784
        %v786 = vld [vmem:[#allocation2] sm:$0xff]
        %v787 = vld [vmem:[#allocation2 + $0x8] sm:$0xff]
        %v788 = vld [vmem:[#allocation2 + $0x10] sm:$0xff]
        %v789 = vpack.c.bf16 %v787, %v786
        %v790 = vpack.c.bf16 %v788, %v788
        %793 = vrot.lane.b32.xlu0 %v789, 127
        %v794 = vpop.permute.xlu0 %793
        %795 = vrot.lane.b32.xlu0 %v790, 127
        %v796 = vpop.permute.xlu0 %795
        %v797 = vrot.slane %v794, 4
        %v798 = vrot.slane %v796, 4
        %vm799 = vcmask 1043456
        %v800 = vsel %vm799, %v797, %v798
        %vm801 = vcmask 1039360
        %v802 = vsel %vm801, %v794, %v800
        %804 = vst [vmem:[#allocation3 + $0x8] sm:$0xff] %v802
        %v805 = vld [vmem:[#allocation2] sm:$0xff]
        %v806 = vld [vmem:[#allocation2 + $0x8] sm:$0xff]
        %v807 = vld [vmem:[#allocation2 + $0x10] sm:$0xff]
        %s808 = scalar_lea.vmem %s3, 1
        %v809 = vld [vmem:[%s808] ss:$2 sm:$0x3]
        %v811 = vperm.slane %v809, 0
        %v812 = vperm.slane %v809, 1
        %813 = vrot.lane.b32.xlu0 %v811, 2
        %v814 = vpop.permute.xlu0 %813
        %815 = vrot.lane.b32.xlu0 %v812, 2
        %v816 = vpop.permute.xlu0 %815
        %vm817 = vcmask 15360
        %v818 = vsel %vm817, %v814, %v816
        %v822 = vmul.f32 %v805, %v814
        %v823 = vmul.f32 %v806, %v818
        %v824 = vmul.f32 %v807, %v816
        %v825 = vpack.c.bf16 %v823, %v822
        %v826 = vpack.c.bf16 %v824, %v824
        %829 = vrot.lane.b32.xlu0 %v825, 126
        %v830 = vpop.permute.xlu0 %829
        %831 = vrot.lane.b32.xlu0 %v826, 126
        %v832 = vpop.permute.xlu0 %831
        %v833 = vrot.slane %v830, 4
        %v834 = vrot.slane %v832, 4
        %v835 = vsel %vm799, %v833, %v834
        %vm836 = vcmask 1031168
        %v837 = vsel %vm836, %v830, %v835
        %839 = vst [vmem:[#allocation3 + $0x10] sm:$0xff] %v837
        %v840 = vld [vmem:[#allocation2] sm:$0xff]
        %v841 = vld [vmem:[#allocation2 + $0x8] sm:$0xff]
        %v842 = vld [vmem:[#allocation2 + $0x10] sm:$0xff]
        %v843 = vld [vmem:[%s3] ss:$2 sm:$0x3]
        %v845 = vperm.slane %v843, 0
        %v846 = vperm.slane %v843, 1
        %847 = vrot.lane.b32.xlu0 %v845, 16
        %v848 = vpop.permute.xlu0 %847
        %849 = vrot.lane.b32.xlu0 %v846, 16
        %v850 = vpop.permute.xlu0 %849
        %vm851 = vcmask 130048
        %v852 = vsel %vm851, %v848, %v850
        %v856 = vmul.f32 %v840, %v848
        %v857 = vmul.f32 %v841, %v852
        %v858 = vmul.f32 %v842, %v850
        %v859 = vpack.c.bf16 %v857, %v856
        %v860 = vpack.c.bf16 %v858, %v858
        %863 = vrot.lane.b32.xlu0 %v859, 112
        %v864 = vpop.permute.xlu0 %863
        %865 = vrot.lane.b32.xlu0 %v860, 112
        %v866 = vpop.permute.xlu0 %865
        %v867 = vrot.slane %v864, 4
        %v868 = vrot.slane %v866, 4
        %v869 = vsel %vm799, %v867, %v868
        %vm870 = vcmask 916480
        %v871 = vsel %vm870, %v864, %v869
        %873 = vst [vmem:[#allocation3 + $0x18] sm:$0xff] %v871
        %v874 = vld [vmem:[#allocation2] sm:$0xff]
        %v875 = vld [vmem:[#allocation2 + $0x8] sm:$0xff]
        %v876 = vld [vmem:[#allocation2 + $0x10] sm:$0xff]
        %v877 = vpack.c.bf16 %v875, %v874
        %v878 = vpack.c.bf16 %v876, %v876
        %881 = vrot.lane.b32.xlu0 %v877, 111
        %v882 = vpop.permute.xlu0 %881
        %883 = vrot.lane.b32.xlu0 %v878, 111
        %v884 = vpop.permute.xlu0 %883
        %v885 = vrot.slane %v882, 4
        %v886 = vrot.slane %v884, 4
        %v887 = vsel %vm799, %v885, %v886
        %vm888 = vcmask 908288
        %v889 = vsel %vm888, %v882, %v887
        %891 = vst [vmem:[#allocation3 + $0x20] sm:$0xff] %v889
        %v892 = vld [vmem:[#allocation2] sm:$0xff]
        %v893 = vld [vmem:[#allocation2 + $0x8] sm:$0xff]
        %v894 = vld [vmem:[#allocation2 + $0x10] sm:$0xff]
        %v895 = vld [vmem:[%s808] ss:$2 sm:$0x3]
        %v897 = vperm.slane %v895, 0
        %v898 = vperm.slane %v895, 1
        %899 = vrot.lane.b32.xlu0 %v897, 18
        %v900 = vpop.permute.xlu0 %899
        %901 = vrot.lane.b32.xlu0 %v898, 18
        %v902 = vpop.permute.xlu0 %901
        %vm903 = vcmask 146432
        %v904 = vsel %vm903, %v900, %v902
        %v908 = vmul.f32 %v892, %v900
        %v909 = vmul.f32 %v893, %v904
        %v910 = vmul.f32 %v894, %v902
        %v911 = vpack.c.bf16 %v909, %v908
        %v912 = vpack.c.bf16 %v910, %v910
        %915 = vrot.lane.b32.xlu0 %v911, 110
        %v916 = vpop.permute.xlu0 %915
        %917 = vrot.lane.b32.xlu0 %v912, 110
        %v918 = vpop.permute.xlu0 %917
        %v919 = vrot.slane %v916, 4
        %v920 = vrot.slane %v918, 4
        %v921 = vsel %vm799, %v919, %v920
        %vm922 = vcmask 900096
        %v923 = vsel %vm922, %v916, %v921
        %925 = vst [vmem:[#allocation3 + $0x28] sm:$0xff] %v923
        %v926 = vld [vmem:[#allocation2] sm:$0xff]
        %v927 = vld [vmem:[#allocation2 + $0x8] sm:$0xff]
        %v928 = vld [vmem:[#allocation2 + $0x10] sm:$0xff]
        %v929 = vld [vmem:[%s3] ss:$2 sm:$0x3]
        %v931 = vperm.slane %v929, 0
        %v932 = vperm.slane %v929, 1
        %933 = vrot.lane.b32.xlu0 %v931, 32
        %v934 = vpop.permute.xlu0 %933
        %935 = vrot.lane.b32.xlu0 %v932, 32
        %v936 = vpop.permute.xlu0 %935
        %vm937 = vcmask 261120
        %v938 = vsel %vm937, %v934, %v936
        %v942 = vmul.f32 %v926, %v934
        %v943 = vmul.f32 %v927, %v938
        %v944 = vmul.f32 %v928, %v936
        %v945 = vpack.c.bf16 %v943, %v942
        %v946 = vpack.c.bf16 %v944, %v944
        %949 = vrot.lane.b32.xlu0 %v945, 96
        %v950 = vpop.permute.xlu0 %949
        %951 = vrot.lane.b32.xlu0 %v946, 96
        %v952 = vpop.permute.xlu0 %951
        %v953 = vrot.slane %v950, 4
        %v954 = vrot.slane %v952, 4
        %v955 = vsel %vm799, %v953, %v954
        %vm956 = vcmask 785408
        %v957 = vsel %vm956, %v950, %v955
        %959 = vst [vmem:[#allocation3 + $0x30] sm:$0xff] %v957
        %v960 = vld [vmem:[#allocation2] sm:$0xff]
        %v961 = vld [vmem:[#allocation2 + $0x8] sm:$0xff]
        %v962 = vld [vmem:[#allocation2 + $0x10] sm:$0xff]
        %v963 = vpack.c.bf16 %v961, %v960
        %v964 = vpack.c.bf16 %v962, %v962
        %967 = vrot.lane.b32.xlu0 %v963, 95
        %v968 = vpop.permute.xlu0 %967
        %969 = vrot.lane.b32.xlu0 %v964, 95
        %v970 = vpop.permute.xlu0 %969
        %v971 = vrot.slane %v968, 4
        %v972 = vrot.slane %v970, 4
        %v973 = vsel %vm799, %v971, %v972
        %vm974 = vcmask 777216
        %v975 = vsel %vm974, %v968, %v973
        %977 = vst [vmem:[#allocation3 + $0x38] sm:$0xff] %v975
        %v978 = vld [vmem:[#allocation2] sm:$0xff]
        %v979 = vld [vmem:[#allocation2 + $0x8] sm:$0xff]
        %v980 = vld [vmem:[#allocation2 + $0x10] sm:$0xff]
        %v981 = vld [vmem:[%s808] ss:$2 sm:$0x3]
        %v983 = vperm.slane %v981, 0
        %v984 = vperm.slane %v981, 1
        %985 = vrot.lane.b32.xlu0 %v983, 34
        %v986 = vpop.permute.xlu0 %985
        %987 = vrot.lane.b32.xlu0 %v984, 34
        %v988 = vpop.permute.xlu0 %987
        %vm989 = vcmask 277504
        %v990 = vsel %vm989, %v986, %v988
        %v994 = vmul.f32 %v978, %v986
        %v995 = vmul.f32 %v979, %v990
        %v996 = vmul.f32 %v980, %v988
        %v997 = vpack.c.bf16 %v995, %v994
        %v998 = vpack.c.bf16 %v996, %v996
        %1001 = vrot.lane.b32.xlu0 %v997, 94
        %v1002 = vpop.permute.xlu0 %1001
        %1003 = vrot.lane.b32.xlu0 %v998, 94
        %v1004 = vpop.permute.xlu0 %1003
        %v1005 = vrot.slane %v1002, 4
        %v1006 = vrot.slane %v1004, 4
        %v1007 = vsel %vm799, %v1005, %v1006
        %vm1008 = vcmask 769024
        %v1009 = vsel %vm1008, %v1002, %v1007
        %1011 = vst [vmem:[#allocation3 + $0x40] sm:$0xff] %v1009
        %v1012 = vld [vmem:[%s6] sm:$0x3]
        %v1013 = vld [vmem:[#allocation3] sm:$0xff]
        %v1014 = vld [vmem:[#allocation3 + $0x8] sm:$0xff]
        %v1015 = vld [vmem:[#allocation3 + $0x10] sm:$0xff]
        %v1016 = vld [vmem:[#allocation3 + $0x18] sm:$0xff]
        %v1017 = vld [vmem:[#allocation3 + $0x20] sm:$0xff]
        %v1018 = vld [vmem:[#allocation3 + $0x28] sm:$0xff]
        %v1019 = vld [vmem:[#allocation3 + $0x30] sm:$0xff]
        %v1020 = vld [vmem:[#allocation3 + $0x38] sm:$0xff]
        %v1021 = vld [vmem:[#allocation3 + $0x40] sm:$0xff]
        %v1022 = vld [vmem:[%s7] sm:$0xf]
        %1024 = vset.pattern.permute.xlu0 0
        %1025 = vperm.xlu0 %1024, %v1022
        %v1026 = vpop.permute.xlu0 %1025
        %v1037 = vunpack.c.l.b16 %v1013
        %v1038 = vunpack.c.h.b16 %v1013
        %v1039 = vunpack.c.l.b16 %v1014
        %v1040 = vunpack.c.h.b16 %v1014
        %v1041 = vunpack.c.l.b16 %v1015
        %v1042 = vunpack.c.h.b16 %v1015
        %v1043 = vunpack.c.l.b16 %v1016
        %v1044 = vunpack.c.h.b16 %v1016
        %v1045 = vunpack.c.l.b16 %v1017
        %v1046 = vunpack.c.h.b16 %v1017
        %v1047 = vunpack.c.l.b16 %v1018
        %v1048 = vunpack.c.h.b16 %v1018
        %v1049 = vunpack.c.l.b16 %v1019
        %v1050 = vunpack.c.h.b16 %v1019
        %v1051 = vunpack.c.l.b16 %v1020
        %v1052 = vunpack.c.h.b16 %v1020
        %v1053 = vunpack.c.l.b16 %v1021
        %v1054 = vunpack.c.h.b16 %v1021
        %v1055 = vpack.c.b16 %v1039, %v1037
        %v1056 = vpack.c.b16 %v1040, %v1038
        %v1057 = vpack.c.b16 %v1043, %v1041
        %v1058 = vpack.c.b16 %v1044, %v1042
        %v1059 = vpack.c.b16 %v1047, %v1045
        %v1060 = vpack.c.b16 %v1048, %v1046
        %v1061 = vpack.c.b16 %v1051, %v1049
        %v1062 = vpack.c.b16 %v1052, %v1050
        %v1063 = vpack.c.b16 %v1053, %v1053
        %v1064 = vpack.c.b16 %v1054, %v1054
        %vm1073 = vcmask 588800
        %v1075 = vsel %vm1073, %v1012, 0
        %v1078 = vsel %vm439, %v1063, 0
        %v1081 = vsel %vm439, %v1064, 0
        %1083 = vmatpush.bf16.msra.mxu0 0
        %1084 = vmatpush.bf16.msra.mxu0 0
        %1085 = vmatpush.bf16.msra.mxu0 0
        %1086 = vmatpush.bf16.msra.mxu0 %v1078
        %1087 = vmatpush.bf16.msra.mxu0 %v1061
        %1088 = vmatpush.bf16.msra.mxu0 %v1059
        %1089 = vmatpush.bf16.msra.mxu0 %v1057
        %1090 = vmatpush.bf16.msra.mxu0 %v1055
        %1091 = vmatmul.bf16.gmra.mxu0 %v1075
        %v1092 = vpop.f32.mrf.mxu0
        %v1093 = vadd.f32 %v1026, %v1092
        %v1094 = vpop.f32.mrf.mxu0
        %1095 = vdwg.mxu0
        %1096 = vmatpush.bf16.msra.mxu0 0
        %1097 = vmatpush.bf16.msra.mxu0 0
        %1098 = vmatpush.bf16.msra.mxu0 0
        %1099 = vmatpush.bf16.msra.mxu0 %v1081
        %1100 = vmatpush.bf16.msra.mxu0 %v1062
        %1101 = vmatpush.bf16.msra.mxu0 %v1060
        %1102 = vmatpush.bf16.msra.mxu0 %v1058
        %1103 = vmatpush.bf16.msra.mxu0 %v1056
        %1104 = vmatmul.bf16.gmra.mxu0 %v1075
        %v1105 = vpop.f32.mrf.mxu0
        %v1106 = vadd.f32 %v1026, %v1105
        %v1107 = vpop.f32.mrf.mxu0
        %1108 = vdwg.mxu0
        %v1109 = vmax.f32 %v1093, 0.0
        %v1110 = vmax.f32 %v1106, 0.0
        %v1113 = vrot.slane %v1110, 4
        %v1114 = vsel %vm439, %v1109, %v1113
        %1115 = vrot.lane.b32.xlu0 %v1114, 17
        %v1116 = vpop.permute.xlu0 %1115
        %v1117 = vrot.slane %v1116, 4
        %v1118 = vsel %vm418, %v1117, %v1116
        %vm1121 = vcmask 1047556
        %vm1122 = vmor %vm1121, %vm617
        %1123 = vst.msk [vmem:[#allocation4] sm:$0xff] %vm1122, %v1118
        %1124 = vst.msk [vmem:[#allocation4 + $0x8] sm:$0xf] %vm422, %v1117
        %v1125 = vld [vmem:[#allocation4] sm:$0xff]
        %v1126 = vld [vmem:[%s3] ss:$2 sm:$0x3]
        %v1128 = vperm.slane %v1126, 0
        %v1129 = vperm.slane %v1126, 1
        %v1130 = vrot.slane %v1129, 4
        %v1131 = vsel %vm439, %v1128, %v1130
        %v1133 = vmul.f32 %v1125, %v1131
        %1135 = vst [vmem:[#allocation1] ss:$2 sm:$0xff] %v1133
        %v1136 = vld.sshfl [vmem:[#allocation1] sm:$0xff pattern:$0x75316420]
        %v1137 = vld.sshfl [vmem:[#allocation1 + $0x8] sm:$0xff pattern:$0x75316420]
        %v1140 = vpack.c.bf16 %v1137, %v1136
        %1141 = vst [vmem:[#allocation5] sm:$0x33] %v1140
        %v1142 = vld [vmem:[#allocation4] sm:$0xff]
        %v1143 = vld [vmem:[#allocation4 + $0x8] sm:$0xf]
        %1146 = vst [vmem:[#allocation1] ss:$2 sm:$0xff] %v1142
        %s1147 = scalar_lea.vmem [#allocation1], 16
        %1148 = vst [vmem:[%s1147] ss:$2 sm:$0xff] %v1143
        %v1149 = vld.sshfl [vmem:[#allocation1] sm:$0xff pattern:$0x75316420]
        %v1150 = vld.sshfl [vmem:[#allocation1 + $0x8] sm:$0xff pattern:$0x75316420]
        %v1151 = vld.sshfl [vmem:[#allocation1 + $0x10] sm:$0xff pattern:$0x75316420]
        %v1155 = vpack.c.bf16 %v1150, %v1149
        %v1156 = vpack.c.bf16 %v1151, %v1151
        %v1159 = vrot.slane %v1155, 6
        %v1160 = vrot.slane %v1156, 6
        %1161 = vrot.lane.b32.xlu0 %v1159, 127
        %v1162 = vpop.permute.xlu0 %1161
        %1163 = vrot.lane.b32.xlu0 %v1160, 127
        %v1164 = vpop.permute.xlu0 %1163
        %v1165 = vrot.slane %v1162, 4
        %v1166 = vrot.slane %v1164, 4
        %v1167 = vsel %vm799, %v1165, %v1166
        %v1168 = vsel %vm801, %v1162, %v1167
        %1170 = vst [vmem:[#allocation5] sm:$0xcc] %v1168
        %v1171 = vld [vmem:[#allocation4] sm:$0xff]
        %v1172 = vld [vmem:[#allocation4 + $0x8] sm:$0xf]
        %v1173 = vld [vmem:[%s808] ss:$2 sm:$0x3]
        %v1175 = vperm.slane %v1173, 0
        %v1176 = vperm.slane %v1173, 1
        %v1177 = vrot.slane %v1176, 4
        %v1178 = vsel %vm439, %v1175, %v1177
        %1179 = vrot.lane.b32.xlu0 %v1178, 2
        %v1180 = vpop.permute.xlu0 %1179
        %v1181 = vrot.slane %v1180, 4
        %v1182 = vsel %vm817, %v1181, %v1180
        %v1185 = vmul.f32 %v1171, %v1182
        %v1186 = vmul.f32 %v1172, %v1181
        %1189 = vst [vmem:[#allocation1] ss:$2 sm:$0xff] %v1185
        %s1190 = scalar_lea.vmem [#allocation1], 16
        %1191 = vst [vmem:[%s1190] ss:$2 sm:$0xff] %v1186
        %v1192 = vld.sshfl [vmem:[#allocation1] sm:$0xff pattern:$0x75316420]
        %v1193 = vld.sshfl [vmem:[#allocation1 + $0x8] sm:$0xff pattern:$0x75316420]
        %v1194 = vld.sshfl [vmem:[#allocation1 + $0x10] sm:$0xff pattern:$0x75316420]
        %v1198 = vpack.c.bf16 %v1193, %v1192
        %v1199 = vpack.c.bf16 %v1194, %v1194
        %1202 = vrot.lane.b32.xlu0 %v1198, 126
        %v1203 = vpop.permute.xlu0 %1202
        %1204 = vrot.lane.b32.xlu0 %v1199, 126
        %v1205 = vpop.permute.xlu0 %1204
        %v1206 = vrot.slane %v1203, 4
        %v1207 = vrot.slane %v1205, 4
        %v1208 = vsel %vm799, %v1206, %v1207
        %v1209 = vsel %vm836, %v1203, %v1208
        %1211 = vst [vmem:[#allocation5 + $0x8] sm:$0x33] %v1209
        %v1212 = vld [vmem:[#allocation4] sm:$0xff]
        %v1213 = vld [vmem:[#allocation4 + $0x8] sm:$0xf]
        %v1214 = vld [vmem:[%s3] ss:$2 sm:$0x3]
        %v1216 = vperm.slane %v1214, 0
        %v1217 = vperm.slane %v1214, 1
        %v1218 = vrot.slane %v1217, 4
        %v1219 = vsel %vm439, %v1216, %v1218
        %1220 = vrot.lane.b32.xlu0 %v1219, 16
        %v1221 = vpop.permute.xlu0 %1220
        %v1222 = vrot.slane %v1221, 4
        %v1223 = vsel %vm851, %v1222, %v1221
        %v1226 = vmul.f32 %v1212, %v1223
        %v1227 = vmul.f32 %v1213, %v1222
        %1230 = vst [vmem:[#allocation1] ss:$2 sm:$0xff] %v1226
        %s1231 = scalar_lea.vmem [#allocation1], 16
        %1232 = vst [vmem:[%s1231] ss:$2 sm:$0xff] %v1227
        %v1233 = vld.sshfl [vmem:[#allocation1] sm:$0xff pattern:$0x75316420]
        %v1234 = vld.sshfl [vmem:[#allocation1 + $0x8] sm:$0xff pattern:$0x75316420]
        %v1235 = vld.sshfl [vmem:[#allocation1 + $0x10] sm:$0xff pattern:$0x75316420]
        %v1239 = vpack.c.bf16 %v1234, %v1233
        %v1240 = vpack.c.bf16 %v1235, %v1235
        %v1243 = vrot.slane %v1239, 6
        %v1244 = vrot.slane %v1240, 6
        %1245 = vrot.lane.b32.xlu0 %v1243, 112
        %v1246 = vpop.permute.xlu0 %1245
        %1247 = vrot.lane.b32.xlu0 %v1244, 112
        %v1248 = vpop.permute.xlu0 %1247
        %v1249 = vrot.slane %v1246, 4
        %v1250 = vrot.slane %v1248, 4
        %v1251 = vsel %vm799, %v1249, %v1250
        %v1252 = vsel %vm870, %v1246, %v1251
        %1254 = vst [vmem:[#allocation5 + $0x8] sm:$0xcc] %v1252
        %v1255 = vld [vmem:[#allocation4] sm:$0xff]
        %v1256 = vld [vmem:[#allocation4 + $0x8] sm:$0xf]
        %1259 = vst [vmem:[#allocation1] ss:$2 sm:$0xff] %v1255
        %s1260 = scalar_lea.vmem [#allocation1], 16
        %1261 = vst [vmem:[%s1260] ss:$2 sm:$0xff] %v1256
        %v1262 = vld.sshfl [vmem:[#allocation1] sm:$0xff pattern:$0x75316420]
        %v1263 = vld.sshfl [vmem:[#allocation1 + $0x8] sm:$0xff pattern:$0x75316420]
        %v1264 = vld.sshfl [vmem:[#allocation1 + $0x10] sm:$0xff pattern:$0x75316420]
        %v1268 = vpack.c.bf16 %v1263, %v1262
        %v1269 = vpack.c.bf16 %v1264, %v1264
        %1272 = vrot.lane.b32.xlu0 %v1268, 111
        %v1273 = vpop.permute.xlu0 %1272
        %1274 = vrot.lane.b32.xlu0 %v1269, 111
        %v1275 = vpop.permute.xlu0 %1274
        %v1276 = vrot.slane %v1273, 4
        %v1277 = vrot.slane %v1275, 4
        %v1278 = vsel %vm799, %v1276, %v1277
        %v1279 = vsel %vm888, %v1273, %v1278
        %1281 = vst [vmem:[#allocation5 + $0x10] sm:$0x33] %v1279
        %v1282 = vld [vmem:[#allocation4] sm:$0xff]
        %v1283 = vld [vmem:[#allocation4 + $0x8] sm:$0xf]
        %v1284 = vld [vmem:[%s808] ss:$2 sm:$0x3]
        %v1286 = vperm.slane %v1284, 0
        %v1287 = vperm.slane %v1284, 1
        %v1288 = vrot.slane %v1287, 4
        %v1289 = vsel %vm439, %v1286, %v1288
        %1290 = vrot.lane.b32.xlu0 %v1289, 18
        %v1291 = vpop.permute.xlu0 %1290
        %v1292 = vrot.slane %v1291, 4
        %v1293 = vsel %vm903, %v1292, %v1291
        %v1296 = vmul.f32 %v1282, %v1293
        %v1297 = vmul.f32 %v1283, %v1292
        %1300 = vst [vmem:[#allocation1] ss:$2 sm:$0xff] %v1296
        %s1301 = scalar_lea.vmem [#allocation1], 16
        %1302 = vst [vmem:[%s1301] ss:$2 sm:$0xff] %v1297
        %v1303 = vld.sshfl [vmem:[#allocation1] sm:$0xff pattern:$0x75316420]
        %v1304 = vld.sshfl [vmem:[#allocation1 + $0x8] sm:$0xff pattern:$0x75316420]
        %v1305 = vld.sshfl [vmem:[#allocation1 + $0x10] sm:$0xff pattern:$0x75316420]
        %v1309 = vpack.c.bf16 %v1304, %v1303
        %v1310 = vpack.c.bf16 %v1305, %v1305
        %v1313 = vrot.slane %v1309, 6
        %v1314 = vrot.slane %v1310, 6
        %1315 = vrot.lane.b32.xlu0 %v1313, 110
        %v1316 = vpop.permute.xlu0 %1315
        %1317 = vrot.lane.b32.xlu0 %v1314, 110
        %v1318 = vpop.permute.xlu0 %1317
        %v1319 = vrot.slane %v1316, 4
        %v1320 = vrot.slane %v1318, 4
        %v1321 = vsel %vm799, %v1319, %v1320
        %v1322 = vsel %vm922, %v1316, %v1321
        %1324 = vst [vmem:[#allocation5 + $0x10] sm:$0xcc] %v1322
        %v1325 = vld [vmem:[#allocation4] sm:$0xff]
        %v1326 = vld [vmem:[#allocation4 + $0x8] sm:$0xf]
        %v1327 = vld [vmem:[%s3] ss:$2 sm:$0x3]
        %v1329 = vperm.slane %v1327, 0
        %v1330 = vperm.slane %v1327, 1
        %v1331 = vrot.slane %v1330, 4
        %v1332 = vsel %vm439, %v1329, %v1331
        %1333 = vrot.lane.b32.xlu0 %v1332, 32
        %v1334 = vpop.permute.xlu0 %1333
        %v1335 = vrot.slane %v1334, 4
        %v1336 = vsel %vm937, %v1335, %v1334
        %v1339 = vmul.f32 %v1325, %v1336
        %v1340 = vmul.f32 %v1326, %v1335
        %1343 = vst [vmem:[#allocation1] ss:$2 sm:$0xff] %v1339
        %s1344 = scalar_lea.vmem [#allocation1], 16
        %1345 = vst [vmem:[%s1344] ss:$2 sm:$0xff] %v1340
        %v1346 = vld.sshfl [vmem:[#allocation1] sm:$0xff pattern:$0x75316420]
        %v1347 = vld.sshfl [vmem:[#allocation1 + $0x8] sm:$0xff pattern:$0x75316420]
        %v1348 = vld.sshfl [vmem:[#allocation1 + $0x10] sm:$0xff pattern:$0x75316420]
        %v1352 = vpack.c.bf16 %v1347, %v1346
        %v1353 = vpack.c.bf16 %v1348, %v1348
        %1356 = vrot.lane.b32.xlu0 %v1352, 96
        %v1357 = vpop.permute.xlu0 %1356
        %1358 = vrot.lane.b32.xlu0 %v1353, 96
        %v1359 = vpop.permute.xlu0 %1358
        %v1360 = vrot.slane %v1357, 4
        %v1361 = vrot.slane %v1359, 4
        %v1362 = vsel %vm799, %v1360, %v1361
        %v1363 = vsel %vm956, %v1357, %v1362
        %1365 = vst [vmem:[#allocation5 + $0x18] sm:$0x33] %v1363
        %v1366 = vld [vmem:[#allocation4] sm:$0xff]
        %v1367 = vld [vmem:[#allocation4 + $0x8] sm:$0xf]
        %1370 = vst [vmem:[#allocation1] ss:$2 sm:$0xff] %v1366
        %s1371 = scalar_lea.vmem [#allocation1], 16
        %1372 = vst [vmem:[%s1371] ss:$2 sm:$0xff] %v1367
        %v1373 = vld.sshfl [vmem:[#allocation1] sm:$0xff pattern:$0x75316420]
        %v1374 = vld.sshfl [vmem:[#allocation1 + $0x8] sm:$0xff pattern:$0x75316420]
        %v1375 = vld.sshfl [vmem:[#allocation1 + $0x10] sm:$0xff pattern:$0x75316420]
        %v1379 = vpack.c.bf16 %v1374, %v1373
        %v1380 = vpack.c.bf16 %v1375, %v1375
        %v1383 = vrot.slane %v1379, 6
        %v1384 = vrot.slane %v1380, 6
        %1385 = vrot.lane.b32.xlu0 %v1383, 95
        %v1386 = vpop.permute.xlu0 %1385
        %1387 = vrot.lane.b32.xlu0 %v1384, 95
        %v1388 = vpop.permute.xlu0 %1387
        %v1389 = vrot.slane %v1386, 4
        %v1390 = vrot.slane %v1388, 4
        %v1391 = vsel %vm799, %v1389, %v1390
        %v1392 = vsel %vm974, %v1386, %v1391
        %1394 = vst [vmem:[#allocation5 + $0x18] sm:$0xcc] %v1392
        %v1395 = vld [vmem:[#allocation4] sm:$0xff]
        %v1396 = vld [vmem:[#allocation4 + $0x8] sm:$0xf]
        %v1397 = vld [vmem:[%s808] ss:$2 sm:$0x3]
        %v1399 = vperm.slane %v1397, 0
        %v1400 = vperm.slane %v1397, 1
        %v1401 = vrot.slane %v1400, 4
        %v1402 = vsel %vm439, %v1399, %v1401
        %1403 = vrot.lane.b32.xlu0 %v1402, 34
        %v1404 = vpop.permute.xlu0 %1403
        %v1405 = vrot.slane %v1404, 4
        %v1406 = vsel %vm989, %v1405, %v1404
        %v1409 = vmul.f32 %v1395, %v1406
        %v1410 = vmul.f32 %v1396, %v1405
        %1413 = vst [vmem:[#allocation1] ss:$2 sm:$0xff] %v1409
        %s1414 = scalar_lea.vmem [#allocation1], 16
        %1415 = vst [vmem:[%s1414] ss:$2 sm:$0xff] %v1410
        %v1416 = vld.sshfl [vmem:[#allocation1] sm:$0xff pattern:$0x75316420]
        %v1417 = vld.sshfl [vmem:[#allocation1 + $0x8] sm:$0xff pattern:$0x75316420]
        %v1418 = vld.sshfl [vmem:[#allocation1 + $0x10] sm:$0xff pattern:$0x75316420]
        %v1422 = vpack.c.bf16 %v1417, %v1416
        %v1423 = vpack.c.bf16 %v1418, %v1418
        %1426 = vrot.lane.b32.xlu0 %v1422, 94
        %v1427 = vpop.permute.xlu0 %1426
        %1428 = vrot.lane.b32.xlu0 %v1423, 94
        %v1429 = vpop.permute.xlu0 %1428
        %v1430 = vrot.slane %v1427, 4
        %v1431 = vrot.slane %v1429, 4
        %v1432 = vsel %vm799, %v1430, %v1431
        %v1433 = vsel %vm1008, %v1427, %v1432
        %1435 = vst [vmem:[#allocation5 + $0x20] sm:$0x33] %v1433
        %v1436 = vld [vmem:[%s8] sm:$0x3]
        %v1437 = vld [vmem:[#allocation5] sm:$0xff]
        %v1438 = vld [vmem:[#allocation5 + $0x8] sm:$0xff]
        %v1439 = vld [vmem:[#allocation5 + $0x10] sm:$0xff]
        %v1440 = vld [vmem:[#allocation5 + $0x18] sm:$0xff]
        %v1441 = vld [vmem:[#allocation5 + $0x20] sm:$0x33]
        %v1442 = vld [vmem:[%s9] sm:$0xf]
        %1444 = vset.pattern.permute.xlu0 0
        %1445 = vperm.xlu0 %1444, %v1442
        %v1446 = vpop.permute.xlu0 %1445
        %v1453 = vunpack.c.l.b16 %v1437
        %v1454 = vunpack.c.h.b16 %v1437
        %v1455 = vunpack.c.l.b16 %v1438
        %v1456 = vunpack.c.h.b16 %v1438
        %v1457 = vunpack.c.l.b16 %v1439
        %v1458 = vunpack.c.h.b16 %v1439
        %v1459 = vunpack.c.l.b16 %v1440
        %v1460 = vunpack.c.h.b16 %v1440
        %v1461 = vunpack.c.l.b16 %v1441
        %v1462 = vunpack.c.h.b16 %v1441
        %v1463 = vpack.c.b16 %v1455, %v1453
        %v1464 = vpack.c.b16 %v1456, %v1454
        %v1465 = vpack.c.b16 %v1459, %v1457
        %v1466 = vpack.c.b16 %v1460, %v1458
        %v1467 = vpack.c.b16 %v1461, %v1461
        %v1468 = vpack.c.b16 %v1462, %v1462
        %vm1473 = vcmask 293888
        %v1475 = vsel %vm1473, %v1436, 0
        %vm1477 = vcmask 1041408
        %v1479 = vsel %vm1477, %v1467, 0
        %v1482 = vsel %vm1477, %v1468, 0
        %1484 = vmatpush.bf16.msra.mxu0 0
        %1485 = vmatpush.bf16.msra.mxu0 0
        %1486 = vmatpush.bf16.msra.mxu0 0
        %1487 = vmatpush.bf16.msra.mxu0 0
        %1488 = vmatpush.bf16.msra.mxu0 0
        %1489 = vmatpush.bf16.msra.mxu0 %v1479
        %1490 = vmatpush.bf16.msra.mxu0 %v1465
        %1491 = vmatpush.bf16.msra.mxu0 %v1463
        %1492 = vmatmul.bf16.gmra.mxu0 %v1475
        %v1493 = vpop.f32.mrf.mxu0
        %v1494 = vadd.f32 %v1446, %v1493
        %v1495 = vpop.f32.mrf.mxu0
        %1496 = vdwg.mxu0
        %1497 = vmatpush.bf16.msra.mxu0 0
        %1498 = vmatpush.bf16.msra.mxu0 0
        %1499 = vmatpush.bf16.msra.mxu0 0
        %1500 = vmatpush.bf16.msra.mxu0 0
        %1501 = vmatpush.bf16.msra.mxu0 0
        %1502 = vmatpush.bf16.msra.mxu0 %v1482
        %1503 = vmatpush.bf16.msra.mxu0 %v1466
        %1504 = vmatpush.bf16.msra.mxu0 %v1464
        %1505 = vmatmul.bf16.gmra.mxu0 %v1475
        %v1506 = vpop.f32.mrf.mxu0
        %v1507 = vadd.f32 %v1446, %v1506
        %v1508 = vpop.f32.mrf.mxu0
        %1509 = vdwg.mxu0
        %v1510 = vmax.f32 %v1494, 0.0
        %v1511 = vmax.f32 %v1507, 0.0
        %v1514 = vrot.slane %v1511, 4
        %v1515 = vsel %vm439, %v1510, %v1514
        %1517 = vst [vmem:[%s416] sm:$0xff] %v1515
        %s1518 = sand.u32 %s258, 1
        %s1519 = scalar_lea.sflag [#allocation8], %s1518
        %s1520 = sand.u32 %s258, 1
        %s1521 = smul.addr %s1520, 8
        %s1522 = scalar_lea.vmem [#allocation11], %s1521
        // Predicated region
        $region69: #{tpu_custom_call.1} parent=59 // pred_check
          %p1523 = pneg %p268
        $region70: #{tpu_custom_call.1} parent=59 // pred_check_branch
          %1525 = sbr.rel (%p1523) target = $region72
        $region71: #{tpu_custom_call.1} parent=59 // pred_region
          %1527 = vsyncadd %s1519, 0
          %s1528 = smul.addr %s30, 2
          %s1529 = smul.addr %s1528, 4
          %s1530 = scalar_lea.hbm %s10, %s1529
          %s1532 = sshll.u32 %s1522, 4
          %s1533 = int_to_ptr.vmem [resolvable:$true] %s1532
          %s1534 = sshll.u32 %s1530, 4
          %s1535 = int_to_ptr.hbm [resolvable:$true] %s1534
          %1537 = dma.vmem_to_hbm [thread:$0]  %s1533, 128, %s1535, %s1519
        $region72: #{tpu_custom_call.1} parent=59 // pred_fallthru
          _
      $region60: #{tpu_custom_call.1} parent=5 // pred_fallthru
        _
      %p1538 = scmp.le.s32.totalorder 2, %s25
      // Predicated region
      $region73: #{tpu_custom_call.1} parent=5 // pred_check
        %p1539 = pneg %p1538
      $region74: #{tpu_custom_call.1} parent=5 // pred_check_branch
        %1541 = sbr.rel (%p1539) target = $region76
      $region75: #{tpu_custom_call.1} parent=5 // pred_region
        %s1542 = ssub.s32 %s25, 2
        // Predicated region
        $region77: #{tpu_custom_call.1} parent=75 // pred_check
          %p1543 = pneg %p274
        $region78: #{tpu_custom_call.1} parent=75 // pred_check_branch
          %1545 = sbr.rel (%p1543) target = $region80
        $region79: #{tpu_custom_call.1} parent=75 // pred_region
          %s1546 = sand.u32 %s259, 1
          %s1547 = scalar_lea.sflag [#allocation8], %s1546
          %s1548 = sand.u32 %s259, 1
          %s1549 = smul.addr %s1548, 8
          %s1550 = scalar_lea.vmem [#allocation11], %s1549
          %1552 = dma.done %s1547, 128
        $region80: #{tpu_custom_call.1} parent=75 // pred_fallthru
          _
      $region76: #{tpu_custom_call.1} parent=5 // pred_fallthru
        _
    $region6: #{tpu_custom_call.1} parent=1 // loop_footer
      %s29 = sadd.s32 1, %s25
    $region7: #{tpu_custom_call.1} parent=1 // loop_footer_branch
      %24 = sbr.rel target = $region3
    $region8: #{tpu_custom_call.1} parent=1 // loop_exit
      _
    %1553 = vsyncpa [#allocation7], 1
    %s1554 = scalar_lea.sflag [#allocation7], 1
    %1555 = vsyncpa %s1554, 1
    %1556 = vsyncpa [#allocation10], 1
    %s1557 = scalar_lea.sflag [#allocation10], 1
    %1558 = vsyncpa %s1557, 1
    %1559 = vsyncpa [#allocation8], 1
    %s1560 = scalar_lea.sflag [#allocation8], 1
    %1561 = vsyncpa %s1560, 1

</llo_original>
